<compile_context>
chip_gen: v6e
topology: v6e:2x2x1
jax: 0.10.0
libtpu: 0.0.40
codegen_flags: <defaults>
</compile_context>

<pallas_src>
import functools

import jax
import jax.numpy as jnp
from jax.experimental import pallas as pl
from jax.experimental.pallas import tpu as pltpu

# TODO(synk): StereoType is not defined in the snippet; assume len(StereoType.values) == 6
STEREO_VOCAB = 6 + 1  # + padding index 0


def _round_up(x, m):
    return ((x + m - 1) // m) * m


def _bond_prop_select_kernel(ia_ref, ic_ref, is_ref, tab_ref, out_ref, *, vocab_sizes):
    """Exact VPU gather-by-select.
       ia/ic/is: (rt, 1) int32.  tab_ref: (va+vc+vs, ppad) f32 stacked
       [aromatic; conjugated; stereo].  out_ref: (rt, 3*ppad)."""
    rt, total = out_ref.shape
    ppad = total // 3
    base = 0
    for col, (idx_ref, vocab) in enumerate(zip((ia_ref, ic_ref, is_ref), vocab_sizes)):
        # Hoisted lane-broadcast of the index column (computed once, reused by
        # every compare below; avoids re-materializing broadcast_in_dim per term).
        idx_b = jnp.broadcast_to(idx_ref[...], (rt, ppad))
        # Chained select over the tiny vocab: exactly one value matches per row,
        # unmatched (e.g. padded partial-block garbage) falls through to 0.
        acc = jnp.where(idx_b == 0, tab_ref[base:base + 1, :], 0.0)
        for v in range(1, vocab):
            acc = jnp.where(idx_b == v, tab_ref[base + v:base + v + 1, :], acc)
        out_ref[:, col * ppad:(col + 1) * ppad] = acc.astype(out_ref.dtype)
        base += vocab


def _bond_prop_mxu_kernel(ia_ref, ic_ref, is_ref, hi_ref, mid_ref, lo_ref, out_ref,
                          *, offsets):
    """3-hot x block-diagonal-table MXU gather (bf16x3 split of the f32 table).
       hi/mid/lo: (128, 3*ppad) bf16.  out_ref: (rt, 3*ppad)."""
    rt = out_ref.shape[0]
    k = hi_ref.shape[0]
    lanes = jax.lax.broadcasted_iota(jnp.int32, (rt, k), 1)
    hot = lanes == (ia_ref[...] + offsets[0])
    hot = hot | (lanes == (ic_ref[...] + offsets[1]))
    hot = hot | (lanes == (is_ref[...] + offsets[2]))
    onehot = jnp.where(hot, 1.0, 0.0).astype(jnp.bfloat16)  # exact 0/1 in bf16
    acc = jnp.dot(onehot, hi_ref[...], preferred_element_type=jnp.float32)
    acc = acc + jnp.dot(onehot, mid_ref[...], preferred_element_type=jnp.float32)
    acc = acc + jnp.dot(onehot, lo_ref[...], preferred_element_type=jnp.float32)
    out_ref[...] = acc.astype(out_ref.dtype)


def bond_property_embedder(prop_bond_aromatic, prop_bond_conjugated, prop_bond_stereo,
                           arom_tab, conj_tab, ster_tab, *,
                           row_tile=2048, out_dtype=jnp.float32, use_mxu=False):
    """prop_* : int arrays of shape (B, S); tables: (V, per_prop) f32.
       Returns (B, S, 3*per_prop) in out_dtype."""
    B, S = prop_bond_aromatic.shape
    per_prop = arom_tab.shape[1]
    assert conj_tab.shape[1] == per_prop and ster_tab.shape[1] == per_prop
    N = B * S
    va, vc, vs = arom_tab.shape[0], conj_tab.shape[0], ster_tab.shape[0]

    # 128-lane alignment guard: pad each per-prop column group to a multiple of 128
    # so every in-kernel store is an unmasked, lane-dense vst.
    ppad = _round_up(max(per_prop, 1), 128)
    out_cols = 3 * ppad

    # Indices as three (N,1) int32 inputs: free reshape, no stack/offset/pad pass.
    ia = prop_bond_aromatic.reshape(N, 1).astype(jnp.int32)
    ic = prop_bond_conjugated.reshape(N, 1).astype(jnp.int32)
    iz = prop_bond_stereo.reshape(N, 1).astype(jnp.int32)

    # Row tile: sublane(8)-aligned, clamped to the problem; shrink to keep >= 4
    # grid steps when there is enough work (per-core pipelining + v7x megacore).
    rt = min(int(row_tile), _round_up(N, 8))
    rt = max(8, (rt // 8) * 8)
    while rt > 512 and pl.cdiv(N, rt) < 4:
        rt = max(8, ((rt // 2) // 8) * 8)
    grid = (pl.cdiv(N, rt),)   # ragged N: Pallas masks the partial last block

    idx_specs = [pl.BlockSpec((rt, 1), lambda i: (i, 0)) for _ in range(3)]
    out_spec = pl.BlockSpec((rt, out_cols), lambda i: (i, 0))
    cparams = pltpu.CompilerParams(
        dimension_semantics=("parallel",),
        vmem_limit_bytes=48 * 1024 * 1024)

    if use_mxu:
        # Block-diagonal table over the stacked 13-entry vocab, K padded to 128
        # (one vreg of lanes -> the one-hot build costs nothing extra).
        K = 128
        assert va + vc + vs <= K
        blk = jnp.zeros((K, out_cols), jnp.float32)
        blk = blk.at[0:va, 0:per_prop].set(arom_tab.astype(jnp.float32))
        blk = blk.at[va:va + vc, ppad:ppad + per_prop].set(conj_tab.astype(jnp.float32))
        blk = blk.at[va + vc:va + vc + vs,
                     2 * ppad:2 * ppad + per_prop].set(ster_tab.astype(jnp.float32))
        # bf16x3 split: hi + mid + lo reconstructs the f32 table to ~1 ulp.
        hi = blk.astype(jnp.bfloat16)
        r1 = blk - hi.astype(jnp.float32)
        mid = r1.astype(jnp.bfloat16)
        lo = (r1 - mid.astype(jnp.float32)).astype(jnp.bfloat16)
        kernel = functools.partial(_bond_prop_mxu_kernel, offsets=(0, va, va + vc))
        extra_in = [hi, mid, lo]
        tab_specs = [pl.BlockSpec((K, out_cols), lambda i: (0, 0)) for _ in range(3)]
    else:
        tab = jnp.concatenate([arom_tab, conj_tab, ster_tab], axis=0).astype(jnp.float32)
        if ppad != per_prop:
            tab = jnp.pad(tab, ((0, 0), (0, ppad - per_prop)))
        kernel = functools.partial(_bond_prop_select_kernel, vocab_sizes=(va, vc, vs))
        extra_in = [tab]
        tab_specs = [pl.BlockSpec((va + vc + vs, ppad), lambda i: (0, 0))]

    out_flat = pl.pallas_call(
        kernel,
        out_shape=jax.ShapeDtypeStruct((N, out_cols), out_dtype),
        grid_spec=pltpu.PrefetchScalarGridSpec(
            num_scalar_prefetch=0,
            grid=grid,
            in_specs=idx_specs + tab_specs,
            out_specs=out_spec),
        compiler_params=cparams,
    )(ia, ic, iz, *extra_in)

    if ppad != per_prop:
        out_flat = out_flat.reshape(N, 3, ppad)[:, :, :per_prop].reshape(N, 3 * per_prop)
    return out_flat.reshape(B, S, 3 * per_prop)


def _make_embedding_table(key, vocab, dim):
    # nn.Embedding default init ~ N(0, 1); padding_idx=0 row zeroed.
    tab = jax.random.normal(key, (vocab, dim), dtype=jnp.float32)
    return tab.at[0].set(0.0)


if __name__ == "__main__":
    key = jax.random.PRNGKey(0)
    k_a, k_c, k_s, k_ia, k_ic, k_is = jax.random.split(key, 6)

    # small shapes: batch=2, seq=128, embedding_size=384 -> per_prop=128
    B, S = 2, 128
    embedding_size = 384
    per_prop = embedding_size // 3

    arom_tab = _make_embedding_table(k_a, 3, per_prop)
    conj_tab = _make_embedding_table(k_c, 3, per_prop)
    ster_tab = _make_embedding_table(k_s, STEREO_VOCAB, per_prop)

    prop_bond_aromatic = jax.random.randint(k_ia, (B, S), 0, 3, dtype=jnp.int32)
    prop_bond_conjugated = jax.random.randint(k_ic, (B, S), 0, 3, dtype=jnp.int32)
    prop_bond_stereo = jax.random.randint(k_is, (B, S), 0, STEREO_VOCAB, dtype=jnp.int32)

    # reference in plain JAX (embedding lookup + concat)
    ref = jnp.concatenate(
        [arom_tab[prop_bond_aromatic],
         conj_tab[prop_bond_conjugated],
         ster_tab[prop_bond_stereo]], axis=-1)

    # Default exact VPU select path (bit-exact gather).
    out = bond_property_embedder(prop_bond_aromatic, prop_bond_conjugated,
                                 prop_bond_stereo, arom_tab, conj_tab, ster_tab)
    out = jax.block_until_ready(out)
    assert out.shape == (B, S, embedding_size)
    assert jnp.allclose(out, ref, atol=1e-6), "VPU path mismatch vs reference"

    # MXU one-hot path (recommended on v7x where the kernel is VALU-bound).
    out_mxu = bond_property_embedder(prop_bond_aromatic, prop_bond_conjugated,
                                     prop_bond_stereo, arom_tab, conj_tab, ster_tab,
                                     use_mxu=True)
    out_mxu = jax.block_until_ready(out_mxu)
    assert jnp.allclose(out_mxu, ref, rtol=1e-5, atol=1e-6), "MXU path mismatch vs reference"

    print("KERNEL_OK")
</pallas_src>

<mosaic_0001>
module attributes {stable_mosaic.version = 11 : i64} {
  func.func @_bond_prop_select_kernel(%arg0: i32, %arg1: memref<256x1xi32, #tpu.memory_space<vmem>>, %arg2: memref<256x1xi32, #tpu.memory_space<vmem>>, %arg3: memref<256x1xi32, #tpu.memory_space<vmem>>, %arg4: memref<13x128xf32, #tpu.memory_space<vmem>>, %arg5: memref<256x384xf32, #tpu.memory_space<vmem>>) attributes {dimension_semantics = [#tpu.dimension_semantics<parallel>], iteration_bounds = array<i64: 1>, scalar_prefetch = 0 : i64, scratch_operands = 0 : i64, tpu.core_type = #tpu.core_type<tc>, window_params = [{transform_indices = @transform_0, window_bounds = array<i64: 256, 1>}, {transform_indices = @transform_1, window_bounds = array<i64: 256, 1>}, {transform_indices = @transform_2, window_bounds = array<i64: 256, 1>}, {pipeline_mode = #tpu.pipeline_mode<synchronous>, transform_indices = @transform_3, window_bounds = array<i64: 13, 128>}, {transform_indices = @transform_4, window_bounds = array<i64: 256, 384>}]} {
    %c0 = arith.constant 0 : index
    %c0_0 = arith.constant 0 : index
    %0 = vector.load %arg1[%c0, %c0_0] : memref<256x1xi32, #tpu.memory_space<vmem>>, vector<256x1xi32>
    %1 = vector.shape_cast %0 : vector<256x1xi32> to vector<256x1xi32>
    %2 = vector.broadcast %1 : vector<256x1xi32> to vector<256x128xi32>
    %c0_i32 = arith.constant 0 : i32
    %3 = vector.broadcast %c0_i32 : i32 to vector<256x128xi32>
    %4 = arith.cmpi eq, %2, %3 : vector<256x128xi32>
    %c0_1 = arith.constant 0 : index
    %c0_2 = arith.constant 0 : index
    %5 = vector.load %arg4[%c0_1, %c0_2] : memref<13x128xf32, #tpu.memory_space<vmem>>, vector<1x128xf32>
    %cst = arith.constant 0.000000e+00 : f32
    %6 = vector.shape_cast %5 : vector<1x128xf32> to vector<1x128xf32>
    %7 = vector.broadcast %6 : vector<1x128xf32> to vector<256x128xf32>
    %8 = vector.broadcast %cst : f32 to vector<256x128xf32>
    %9 = arith.select %4, %7, %8 : vector<256x128xi1>, vector<256x128xf32>
    %c1_i32 = arith.constant 1 : i32
    %10 = vector.broadcast %c1_i32 : i32 to vector<256x128xi32>
    %11 = arith.cmpi eq, %2, %10 : vector<256x128xi32>
    %c1 = arith.constant 1 : index
    %c0_3 = arith.constant 0 : index
    %12 = vector.load %arg4[%c1, %c0_3] : memref<13x128xf32, #tpu.memory_space<vmem>>, vector<1x128xf32>
    %13 = vector.shape_cast %12 : vector<1x128xf32> to vector<1x128xf32>
    %14 = vector.broadcast %13 : vector<1x128xf32> to vector<256x128xf32>
    %15 = arith.select %11, %14, %9 : vector<256x128xi1>, vector<256x128xf32>
    %c2_i32 = arith.constant 2 : i32
    %16 = vector.broadcast %c2_i32 : i32 to vector<256x128xi32>
    %17 = arith.cmpi eq, %2, %16 : vector<256x128xi32>
    %c2 = arith.constant 2 : index
    %c0_4 = arith.constant 0 : index
    %18 = vector.load %arg4[%c2, %c0_4] : memref<13x128xf32, #tpu.memory_space<vmem>>, vector<1x128xf32>
    %19 = vector.shape_cast %18 : vector<1x128xf32> to vector<1x128xf32>
    %20 = vector.broadcast %19 : vector<1x128xf32> to vector<256x128xf32>
    %21 = arith.select %17, %20, %15 : vector<256x128xi1>, vector<256x128xf32>
    %c0_5 = arith.constant 0 : index
    %c0_6 = arith.constant 0 : index
    %22 = vector.load %arg5[%c0_5, %c0_6] : memref<256x384xf32, #tpu.memory_space<vmem>>, vector<256x128xf32>
    tpu.vector_store %arg5[%c0_5, %c0_6], %21 {strides = array<i32>} : memref<256x384xf32, #tpu.memory_space<vmem>>, vector<256x128xf32>,
    %c0_7 = arith.constant 0 : index
    %c0_8 = arith.constant 0 : index
    %23 = vector.load %arg2[%c0_7, %c0_8] : memref<256x1xi32, #tpu.memory_space<vmem>>, vector<256x1xi32>
    %24 = vector.shape_cast %23 : vector<256x1xi32> to vector<256x1xi32>
    %25 = vector.broadcast %24 : vector<256x1xi32> to vector<256x128xi32>
    %c0_i32_9 = arith.constant 0 : i32
    %26 = vector.broadcast %c0_i32_9 : i32 to vector<256x128xi32>
    %27 = arith.cmpi eq, %25, %26 : vector<256x128xi32>
    %c3 = arith.constant 3 : index
    %c0_10 = arith.constant 0 : index
    %28 = vector.load %arg4[%c3, %c0_10] : memref<13x128xf32, #tpu.memory_space<vmem>>, vector<1x128xf32>
    %cst_11 = arith.constant 0.000000e+00 : f32
    %29 = vector.shape_cast %28 : vector<1x128xf32> to vector<1x128xf32>
    %30 = vector.broadcast %29 : vector<1x128xf32> to vector<256x128xf32>
    %31 = vector.broadcast %cst_11 : f32 to vector<256x128xf32>
    %32 = arith.select %27, %30, %31 : vector<256x128xi1>, vector<256x128xf32>
    %c1_i32_12 = arith.constant 1 : i32
    %33 = vector.broadcast %c1_i32_12 : i32 to vector<256x128xi32>
    %34 = arith.cmpi eq, %25, %33 : vector<256x128xi32>
    %c4 = arith.constant 4 : index
    %c0_13 = arith.constant 0 : index
    %35 = vector.load %arg4[%c4, %c0_13] : memref<13x128xf32, #tpu.memory_space<vmem>>, vector<1x128xf32>
    %36 = vector.shape_cast %35 : vector<1x128xf32> to vector<1x128xf32>
    %37 = vector.broadcast %36 : vector<1x128xf32> to vector<256x128xf32>
    %38 = arith.select %34, %37, %32 : vector<256x128xi1>, vector<256x128xf32>
    %c2_i32_14 = arith.constant 2 : i32
    %39 = vector.broadcast %c2_i32_14 : i32 to vector<256x128xi32>
    %40 = arith.cmpi eq, %25, %39 : vector<256x128xi32>
    %c5 = arith.constant 5 : index
    %c0_15 = arith.constant 0 : index
    %41 = vector.load %arg4[%c5, %c0_15] : memref<13x128xf32, #tpu.memory_space<vmem>>, vector<1x128xf32>
    %42 = vector.shape_cast %41 : vector<1x128xf32> to vector<1x128xf32>
    %43 = vector.broadcast %42 : vector<1x128xf32> to vector<256x128xf32>
    %44 = arith.select %40, %43, %38 : vector<256x128xi1>, vector<256x128xf32>
    %c0_16 = arith.constant 0 : index
    %c128 = arith.constant 128 : index
    %45 = vector.load %arg5[%c0_16, %c128] : memref<256x384xf32, #tpu.memory_space<vmem>>, vector<256x128xf32>
    tpu.vector_store %arg5[%c0_16, %c128], %44 {strides = array<i32>} : memref<256x384xf32, #tpu.memory_space<vmem>>, vector<256x128xf32>,
    %c0_17 = arith.constant 0 : index
    %c0_18 = arith.constant 0 : index
    %46 = vector.load %arg3[%c0_17, %c0_18] : memref<256x1xi32, #tpu.memory_space<vmem>>, vector<256x1xi32>
    %47 = vector.shape_cast %46 : vector<256x1xi32> to vector<256x1xi32>
    %48 = vector.broadcast %47 : vector<256x1xi32> to vector<256x128xi32>
    %c0_i32_19 = arith.constant 0 : i32
    %49 = vector.broadcast %c0_i32_19 : i32 to vector<256x128xi32>
    %50 = arith.cmpi eq, %48, %49 : vector<256x128xi32>
    %c6 = arith.constant 6 : index
    %c0_20 = arith.constant 0 : index
    %51 = vector.load %arg4[%c6, %c0_20] : memref<13x128xf32, #tpu.memory_space<vmem>>, vector<1x128xf32>
    %cst_21 = arith.constant 0.000000e+00 : f32
    %52 = vector.shape_cast %51 : vector<1x128xf32> to vector<1x128xf32>
    %53 = vector.broadcast %52 : vector<1x128xf32> to vector<256x128xf32>
    %54 = vector.broadcast %cst_21 : f32 to vector<256x128xf32>
    %55 = arith.select %50, %53, %54 : vector<256x128xi1>, vector<256x128xf32>
    %c1_i32_22 = arith.constant 1 : i32
    %56 = vector.broadcast %c1_i32_22 : i32 to vector<256x128xi32>
    %57 = arith.cmpi eq, %48, %56 : vector<256x128xi32>
    %c7 = arith.constant 7 : index
    %c0_23 = arith.constant 0 : index
    %58 = vector.load %arg4[%c7, %c0_23] : memref<13x128xf32, #tpu.memory_space<vmem>>, vector<1x128xf32>
    %59 = vector.shape_cast %58 : vector<1x128xf32> to vector<1x128xf32>
    %60 = vector.broadcast %59 : vector<1x128xf32> to vector<256x128xf32>
    %61 = arith.select %57, %60, %55 : vector<256x128xi1>, vector<256x128xf32>
    %c2_i32_24 = arith.constant 2 : i32
    %62 = vector.broadcast %c2_i32_24 : i32 to vector<256x128xi32>
    %63 = arith.cmpi eq, %48, %62 : vector<256x128xi32>
    %c8 = arith.constant 8 : index
    %c0_25 = arith.constant 0 : index
    %64 = vector.load %arg4[%c8, %c0_25] : memref<13x128xf32, #tpu.memory_space<vmem>>, vector<1x128xf32>
    %65 = vector.shape_cast %64 : vector<1x128xf32> to vector<1x128xf32>
    %66 = vector.broadcast %65 : vector<1x128xf32> to vector<256x128xf32>
    %67 = arith.select %63, %66, %61 : vector<256x128xi1>, vector<256x128xf32>
    %c3_i32 = arith.constant 3 : i32
    %68 = vector.broadcast %c3_i32 : i32 to vector<256x128xi32>
    %69 = arith.cmpi eq, %48, %68 : vector<256x128xi32>
    %c9 = arith.constant 9 : index
    %c0_26 = arith.constant 0 : index
    %70 = vector.load %arg4[%c9, %c0_26] : memref<13x128xf32, #tpu.memory_space<vmem>>, vector<1x128xf32>
    %71 = vector.shape_cast %70 : vector<1x128xf32> to vector<1x128xf32>
    %72 = vector.broadcast %71 : vector<1x128xf32> to vector<256x128xf32>
    %73 = arith.select %69, %72, %67 : vector<256x128xi1>, vector<256x128xf32>
    %c4_i32 = arith.constant 4 : i32
    %74 = vector.broadcast %c4_i32 : i32 to vector<256x128xi32>
    %75 = arith.cmpi eq, %48, %74 : vector<256x128xi32>
    %c10 = arith.constant 10 : index
    %c0_27 = arith.constant 0 : index
    %76 = vector.load %arg4[%c10, %c0_27] : memref<13x128xf32, #tpu.memory_space<vmem>>, vector<1x128xf32>
    %77 = vector.shape_cast %76 : vector<1x128xf32> to vector<1x128xf32>
    %78 = vector.broadcast %77 : vector<1x128xf32> to vector<256x128xf32>
    %79 = arith.select %75, %78, %73 : vector<256x128xi1>, vector<256x128xf32>
    %c5_i32 = arith.constant 5 : i32
    %80 = vector.broadcast %c5_i32 : i32 to vector<256x128xi32>
    %81 = arith.cmpi eq, %48, %80 : vector<256x128xi32>
    %c11 = arith.constant 11 : index
    %c0_28 = arith.constant 0 : index
    %82 = vector.load %arg4[%c11, %c0_28] : memref<13x128xf32, #tpu.memory_space<vmem>>, vector<1x128xf32>
    %83 = vector.shape_cast %82 : vector<1x128xf32> to vector<1x128xf32>
    %84 = vector.broadcast %83 : vector<1x128xf32> to vector<256x128xf32>
    %85 = arith.select %81, %84, %79 : vector<256x128xi1>, vector<256x128xf32>
    %c6_i32 = arith.constant 6 : i32
    %86 = vector.broadcast %c6_i32 : i32 to vector<256x128xi32>
    %87 = arith.cmpi eq, %48, %86 : vector<256x128xi32>
    %c12 = arith.constant 12 : index
    %c0_29 = arith.constant 0 : index
    %88 = vector.load %arg4[%c12, %c0_29] : memref<13x128xf32, #tpu.memory_space<vmem>>, vector<1x128xf32>
    %89 = vector.shape_cast %88 : vector<1x128xf32> to vector<1x128xf32>
    %90 = vector.broadcast %89 : vector<1x128xf32> to vector<256x128xf32>
    %91 = arith.select %87, %90, %85 : vector<256x128xi1>, vector<256x128xf32>
    %c0_30 = arith.constant 0 : index
    %c256 = arith.constant 256 : index
    %92 = vector.load %arg5[%c0_30, %c256] : memref<256x384xf32, #tpu.memory_space<vmem>>, vector<256x128xf32>
    tpu.vector_store %arg5[%c0_30, %c256], %91 {strides = array<i32>} : memref<256x384xf32, #tpu.memory_space<vmem>>, vector<256x128xf32>,
    return
  }
  func.func @transform_0(%arg0: i32) -> (i32, i32) {
    %c0_i32 = arith.constant 0 : i32
    %c0_i32_0 = arith.constant 0 : i32
    return %arg0, %c0_i32 : i32, i32
  }
  func.func @transform_1(%arg0: i32) -> (i32, i32) {
    %c0_i32 = arith.constant 0 : i32
    %c0_i32_0 = arith.constant 0 : i32
    return %arg0, %c0_i32 : i32, i32
  }
  func.func @transform_2(%arg0: i32) -> (i32, i32) {
    %c0_i32 = arith.constant 0 : i32
    %c0_i32_0 = arith.constant 0 : i32
    return %arg0, %c0_i32 : i32, i32
  }
  func.func @transform_3(%arg0: i32) -> (i32, i32) {
    %c0_i32 = arith.constant 0 : i32
    %c0_i32_0 = arith.constant 0 : i32
    %c0_i32_1 = arith.constant 0 : i32
    return %c0_i32, %c0_i32_0 : i32, i32
  }
  func.func @transform_4(%arg0: i32) -> (i32, i32) {
    %c0_i32 = arith.constant 0 : i32
    %c0_i32_0 = arith.constant 0 : i32
    return %arg0, %c0_i32 : i32, i32
  }
}

</mosaic_0001>

<llo_original>
// kernel: tpu_custom_call.1
$region0: #{tpu_custom_call.1}
  #allocation0 [shape = 'u32[]', space=smem, size = 0x4, offset = 0x4, fixed_abs, tag = 'smem constant byte address 0x4 - core index']
  #allocation1 [shape = 'u32[144,128]{1,0:T(1,128)}', space=vmem, size = 0x12000, scoped, tag = 'internal scratch']
  %s0 = inlined_call_operand.vmem [shape: s32[256,1], index: 0, kind: input, shape index: {}]
  %s1 = inlined_call_operand.vmem [shape: s32[256,1], index: 1, kind: input, shape index: {}]
  %s2 = inlined_call_operand.vmem [shape: s32[256,1], index: 2, kind: input, shape index: {}]
  %s3 = inlined_call_operand.vmem [shape: f32[13,128], index: 3, kind: input, shape index: {}]
  %s4 = inlined_call_operand.hbm [shape: f32[256,384], index: 4, kind: output, shape index: {}]
  %s5 = sld [smem:[#allocation0]]
  $region26: #{tpu_custom_call.1} parent=0
    _
  %s7 = ssub.s32 1, %s5
  %s8 = scalar_select 0, %s7, %s5
  $region1: #{tpu_custom_call.1} parent=0
    #allocation2 [shape = 'u8[393216]{0}', space=vmem, size = 0x60000, scoped, tag = 'output window, operand 0, single buffered']
    #allocation3 [shape = 's32[1]{0}', space=sflag, size = 0x4, scoped, tag = 'scoped memory for tpu_custom_call.1']
    %9 = vsyncpa [#allocation3], 0
    // Predicated region
    $region2: #{tpu_custom_call.1} parent=1 // pred_check
      _
    $region3: #{tpu_custom_call.1} parent=1 // pred_check_branch
      %11 = sbr.rel (0) target = $region5
    $region4: #{tpu_custom_call.1} parent=1 // pred_region
      _
    $region5: #{tpu_custom_call.1} parent=1 // pred_fallthru
      _
    // Predicated region
    $region6: #{tpu_custom_call.1} parent=1 // pred_check
      _
    $region7: #{tpu_custom_call.1} parent=1 // pred_check_branch
      %13 = sbr.rel (0) target = $region9
    $region8: #{tpu_custom_call.1} parent=1 // pred_region
      _
    $region9: #{tpu_custom_call.1} parent=1 // pred_fallthru
      _
    // Predicated region
    $region10: #{tpu_custom_call.1} parent=1 // pred_check
      _
    $region11: #{tpu_custom_call.1} parent=1 // pred_check_branch
      %15 = sbr.rel (0) target = $region13
    $region12: #{tpu_custom_call.1} parent=1 // pred_region
      _
    $region13: #{tpu_custom_call.1} parent=1 // pred_fallthru
      _
    // Predicated region
    $region14: #{tpu_custom_call.1} parent=1 // pred_check
      _
    $region15: #{tpu_custom_call.1} parent=1 // pred_check_branch
      %17 = sbr.rel (0) target = $region17
    $region16: #{tpu_custom_call.1} parent=1 // pred_region
      _
    $region17: #{tpu_custom_call.1} parent=1 // pred_fallthru
      _
    %v18 = vld [vmem:[%s0] sm:$0xff]
    %v19 = vld [vmem:[%s0 + $0x8] sm:$0xff]
    %v20 = vld [vmem:[%s0 + $0x10] sm:$0xff]
    %v21 = vld [vmem:[%s0 + $0x18] sm:$0xff]
    %v22 = vld [vmem:[%s0 + $0x20] sm:$0xff]
    %v23 = vld [vmem:[%s0 + $0x28] sm:$0xff]
    %v24 = vld [vmem:[%s0 + $0x30] sm:$0xff]
    %v25 = vld [vmem:[%s0 + $0x38] sm:$0xff]
    %v26 = vld [vmem:[%s0 + $0x40] sm:$0xff]
    %v27 = vld [vmem:[%s0 + $0x48] sm:$0xff]
    %v28 = vld [vmem:[%s0 + $0x50] sm:$0xff]
    %v29 = vld [vmem:[%s0 + $0x58] sm:$0xff]
    %v30 = vld [vmem:[%s0 + $0x60] sm:$0xff]
    %v31 = vld [vmem:[%s0 + $0x68] sm:$0xff]
    %v32 = vld [vmem:[%s0 + $0x70] sm:$0xff]
    %v33 = vld [vmem:[%s0 + $0x78] sm:$0xff]
    %v34 = vld [vmem:[%s0 + $0x80] sm:$0xff]
    %v35 = vld [vmem:[%s0 + $0x88] sm:$0xff]
    %v36 = vld [vmem:[%s0 + $0x90] sm:$0xff]
    %v37 = vld [vmem:[%s0 + $0x98] sm:$0xff]
    %v38 = vld [vmem:[%s0 + $0xa0] sm:$0xff]
    %v39 = vld [vmem:[%s0 + $0xa8] sm:$0xff]
    %v40 = vld [vmem:[%s0 + $0xb0] sm:$0xff]
    %v41 = vld [vmem:[%s0 + $0xb8] sm:$0xff]
    %v42 = vld [vmem:[%s0 + $0xc0] sm:$0xff]
    %v43 = vld [vmem:[%s0 + $0xc8] sm:$0xff]
    %v44 = vld [vmem:[%s0 + $0xd0] sm:$0xff]
    %v45 = vld [vmem:[%s0 + $0xd8] sm:$0xff]
    %v46 = vld [vmem:[%s0 + $0xe0] sm:$0xff]
    %v47 = vld [vmem:[%s0 + $0xe8] sm:$0xff]
    %v48 = vld [vmem:[%s0 + $0xf0] sm:$0xff]
    %v49 = vld [vmem:[%s0 + $0xf8] sm:$0xff]
    %50 = vset.pattern.permute.xlu0 0
    %51 = vperm.xlu0 %50, %v18
    %v52 = vpop.permute.xlu0 %51
    %53 = vset.pattern.permute.xlu0 0
    %54 = vperm.xlu0 %53, %v19
    %v55 = vpop.permute.xlu0 %54
    %56 = vset.pattern.permute.xlu0 0
    %57 = vperm.xlu0 %56, %v20
    %v58 = vpop.permute.xlu0 %57
    %59 = vset.pattern.permute.xlu0 0
    %60 = vperm.xlu0 %59, %v21
    %v61 = vpop.permute.xlu0 %60
    %62 = vset.pattern.permute.xlu0 0
    %63 = vperm.xlu0 %62, %v22
    %v64 = vpop.permute.xlu0 %63
    %65 = vset.pattern.permute.xlu0 0
    %66 = vperm.xlu0 %65, %v23
    %v67 = vpop.permute.xlu0 %66
    %68 = vset.pattern.permute.xlu0 0
    %69 = vperm.xlu0 %68, %v24
    %v70 = vpop.permute.xlu0 %69
    %71 = vset.pattern.permute.xlu0 0
    %72 = vperm.xlu0 %71, %v25
    %v73 = vpop.permute.xlu0 %72
    %74 = vset.pattern.permute.xlu0 0
    %75 = vperm.xlu0 %74, %v26
    %v76 = vpop.permute.xlu0 %75
    %77 = vset.pattern.permute.xlu0 0
    %78 = vperm.xlu0 %77, %v27
    %v79 = vpop.permute.xlu0 %78
    %80 = vset.pattern.permute.xlu0 0
    %81 = vperm.xlu0 %80, %v28
    %v82 = vpop.permute.xlu0 %81
    %83 = vset.pattern.permute.xlu0 0
    %84 = vperm.xlu0 %83, %v29
    %v85 = vpop.permute.xlu0 %84
    %86 = vset.pattern.permute.xlu0 0
    %87 = vperm.xlu0 %86, %v30
    %v88 = vpop.permute.xlu0 %87
    %89 = vset.pattern.permute.xlu0 0
    %90 = vperm.xlu0 %89, %v31
    %v91 = vpop.permute.xlu0 %90
    %92 = vset.pattern.permute.xlu0 0
    %93 = vperm.xlu0 %92, %v32
    %v94 = vpop.permute.xlu0 %93
    %95 = vset.pattern.permute.xlu0 0
    %96 = vperm.xlu0 %95, %v33
    %v97 = vpop.permute.xlu0 %96
    %98 = vset.pattern.permute.xlu0 0
    %99 = vperm.xlu0 %98, %v34
    %v100 = vpop.permute.xlu0 %99
    %101 = vset.pattern.permute.xlu0 0
    %102 = vperm.xlu0 %101, %v35
    %v103 = vpop.permute.xlu0 %102
    %104 = vset.pattern.permute.xlu0 0
    %105 = vperm.xlu0 %104, %v36
    %v106 = vpop.permute.xlu0 %105
    %107 = vset.pattern.permute.xlu0 0
    %108 = vperm.xlu0 %107, %v37
    %v109 = vpop.permute.xlu0 %108
    %110 = vset.pattern.permute.xlu0 0
    %111 = vperm.xlu0 %110, %v38
    %v112 = vpop.permute.xlu0 %111
    %113 = vset.pattern.permute.xlu0 0
    %114 = vperm.xlu0 %113, %v39
    %v115 = vpop.permute.xlu0 %114
    %116 = vset.pattern.permute.xlu0 0
    %117 = vperm.xlu0 %116, %v40
    %v118 = vpop.permute.xlu0 %117
    %119 = vset.pattern.permute.xlu0 0
    %120 = vperm.xlu0 %119, %v41
    %v121 = vpop.permute.xlu0 %120
    %122 = vset.pattern.permute.xlu0 0
    %123 = vperm.xlu0 %122, %v42
    %v124 = vpop.permute.xlu0 %123
    %125 = vset.pattern.permute.xlu0 0
    %126 = vperm.xlu0 %125, %v43
    %v127 = vpop.permute.xlu0 %126
    %128 = vset.pattern.permute.xlu0 0
    %129 = vperm.xlu0 %128, %v44
    %v130 = vpop.permute.xlu0 %129
    %131 = vset.pattern.permute.xlu0 0
    %132 = vperm.xlu0 %131, %v45
    %v133 = vpop.permute.xlu0 %132
    %134 = vset.pattern.permute.xlu0 0
    %135 = vperm.xlu0 %134, %v46
    %v136 = vpop.permute.xlu0 %135
    %137 = vset.pattern.permute.xlu0 0
    %138 = vperm.xlu0 %137, %v47
    %v139 = vpop.permute.xlu0 %138
    %140 = vset.pattern.permute.xlu0 0
    %141 = vperm.xlu0 %140, %v48
    %v142 = vpop.permute.xlu0 %141
    %143 = vset.pattern.permute.xlu0 0
    %144 = vperm.xlu0 %143, %v49
    %v145 = vpop.permute.xlu0 %144
    %vm146 = vcmp.eq.s32.totalorder %v52, 0
    %vm147 = vcmp.eq.s32.totalorder %v55, 0
    %vm148 = vcmp.eq.s32.totalorder %v58, 0
    %vm149 = vcmp.eq.s32.totalorder %v61, 0
    %vm150 = vcmp.eq.s32.totalorder %v64, 0
    %vm151 = vcmp.eq.s32.totalorder %v67, 0
    %vm152 = vcmp.eq.s32.totalorder %v70, 0
    %vm153 = vcmp.eq.s32.totalorder %v73, 0
    %vm154 = vcmp.eq.s32.totalorder %v76, 0
    %vm155 = vcmp.eq.s32.totalorder %v79, 0
    %vm156 = vcmp.eq.s32.totalorder %v82, 0
    %vm157 = vcmp.eq.s32.totalorder %v85, 0
    %vm158 = vcmp.eq.s32.totalorder %v88, 0
    %vm159 = vcmp.eq.s32.totalorder %v91, 0
    %vm160 = vcmp.eq.s32.totalorder %v94, 0
    %vm161 = vcmp.eq.s32.totalorder %v97, 0
    %vm162 = vcmp.eq.s32.totalorder %v100, 0
    %vm163 = vcmp.eq.s32.totalorder %v103, 0
    %vm164 = vcmp.eq.s32.totalorder %v106, 0
    %vm165 = vcmp.eq.s32.totalorder %v109, 0
    %vm166 = vcmp.eq.s32.totalorder %v112, 0
    %vm167 = vcmp.eq.s32.totalorder %v115, 0
    %vm168 = vcmp.eq.s32.totalorder %v118, 0
    %vm169 = vcmp.eq.s32.totalorder %v121, 0
    %vm170 = vcmp.eq.s32.totalorder %v124, 0
    %vm171 = vcmp.eq.s32.totalorder %v127, 0
    %vm172 = vcmp.eq.s32.totalorder %v130, 0
    %vm173 = vcmp.eq.s32.totalorder %v133, 0
    %vm174 = vcmp.eq.s32.totalorder %v136, 0
    %vm175 = vcmp.eq.s32.totalorder %v139, 0
    %vm176 = vcmp.eq.s32.totalorder %v142, 0
    %vm177 = vcmp.eq.s32.totalorder %v145, 0
    %v178 = vld [vmem:[%s3] sm:$0x1]
    %v179 = vlaneseq
    %v180 = vshrl.u32 %v179, 7
    %v181 = vsub.s32 0, %v180
    %v182 = vrot.slane %v178, %v181
    %v183 = vsel %vm146, %v182, 0.0
    %v184 = vsel %vm147, %v182, 0.0
    %v185 = vsel %vm148, %v182, 0.0
    %v186 = vsel %vm149, %v182, 0.0
    %v187 = vsel %vm150, %v182, 0.0
    %v188 = vsel %vm151, %v182, 0.0
    %v189 = vsel %vm152, %v182, 0.0
    %v190 = vsel %vm153, %v182, 0.0
    %v191 = vsel %vm154, %v182, 0.0
    %v192 = vsel %vm155, %v182, 0.0
    %v193 = vsel %vm156, %v182, 0.0
    %v194 = vsel %vm157, %v182, 0.0
    %v195 = vsel %vm158, %v182, 0.0
    %v196 = vsel %vm159, %v182, 0.0
    %v197 = vsel %vm160, %v182, 0.0
    %v198 = vsel %vm161, %v182, 0.0
    %v199 = vsel %vm162, %v182, 0.0
    %v200 = vsel %vm163, %v182, 0.0
    %v201 = vsel %vm164, %v182, 0.0
    %v202 = vsel %vm165, %v182, 0.0
    %v203 = vsel %vm166, %v182, 0.0
    %v204 = vsel %vm167, %v182, 0.0
    %v205 = vsel %vm168, %v182, 0.0
    %v206 = vsel %vm169, %v182, 0.0
    %v207 = vsel %vm170, %v182, 0.0
    %v208 = vsel %vm171, %v182, 0.0
    %v209 = vsel %vm172, %v182, 0.0
    %v210 = vsel %vm173, %v182, 0.0
    %v211 = vsel %vm174, %v182, 0.0
    %v212 = vsel %vm175, %v182, 0.0
    %v213 = vsel %vm176, %v182, 0.0
    %v214 = vsel %vm177, %v182, 0.0
    %vm215 = vcmp.eq.s32.totalorder %v52, 1
    %vm216 = vcmp.eq.s32.totalorder %v55, 1
    %vm217 = vcmp.eq.s32.totalorder %v58, 1
    %vm218 = vcmp.eq.s32.totalorder %v61, 1
    %vm219 = vcmp.eq.s32.totalorder %v64, 1
    %vm220 = vcmp.eq.s32.totalorder %v67, 1
    %vm221 = vcmp.eq.s32.totalorder %v70, 1
    %vm222 = vcmp.eq.s32.totalorder %v73, 1
    %vm223 = vcmp.eq.s32.totalorder %v76, 1
    %vm224 = vcmp.eq.s32.totalorder %v79, 1
    %vm225 = vcmp.eq.s32.totalorder %v82, 1
    %vm226 = vcmp.eq.s32.totalorder %v85, 1
    %vm227 = vcmp.eq.s32.totalorder %v88, 1
    %vm228 = vcmp.eq.s32.totalorder %v91, 1
    %vm229 = vcmp.eq.s32.totalorder %v94, 1
    %vm230 = vcmp.eq.s32.totalorder %v97, 1
    %vm231 = vcmp.eq.s32.totalorder %v100, 1
    %vm232 = vcmp.eq.s32.totalorder %v103, 1
    %vm233 = vcmp.eq.s32.totalorder %v106, 1
    %vm234 = vcmp.eq.s32.totalorder %v109, 1
    %vm235 = vcmp.eq.s32.totalorder %v112, 1
    %vm236 = vcmp.eq.s32.totalorder %v115, 1
    %vm237 = vcmp.eq.s32.totalorder %v118, 1
    %vm238 = vcmp.eq.s32.totalorder %v121, 1
    %vm239 = vcmp.eq.s32.totalorder %v124, 1
    %vm240 = vcmp.eq.s32.totalorder %v127, 1
    %vm241 = vcmp.eq.s32.totalorder %v130, 1
    %vm242 = vcmp.eq.s32.totalorder %v133, 1
    %vm243 = vcmp.eq.s32.totalorder %v136, 1
    %vm244 = vcmp.eq.s32.totalorder %v139, 1
    %vm245 = vcmp.eq.s32.totalorder %v142, 1
    %vm246 = vcmp.eq.s32.totalorder %v145, 1
    %v247 = vld [vmem:[%s3 + $0x1] sm:$0x1]
    %v248 = vlaneseq
    %v249 = vshrl.u32 %v248, 7
    %v250 = vsub.s32 0, %v249
    %v251 = vrot.slane %v247, %v250
    %v252 = vsel %vm215, %v251, %v183
    %v253 = vsel %vm216, %v251, %v184
    %v254 = vsel %vm217, %v251, %v185
    %v255 = vsel %vm218, %v251, %v186
    %v256 = vsel %vm219, %v251, %v187
    %v257 = vsel %vm220, %v251, %v188
    %v258 = vsel %vm221, %v251, %v189
    %v259 = vsel %vm222, %v251, %v190
    %v260 = vsel %vm223, %v251, %v191
    %v261 = vsel %vm224, %v251, %v192
    %v262 = vsel %vm225, %v251, %v193
    %v263 = vsel %vm226, %v251, %v194
    %v264 = vsel %vm227, %v251, %v195
    %v265 = vsel %vm228, %v251, %v196
    %v266 = vsel %vm229, %v251, %v197
    %v267 = vsel %vm230, %v251, %v198
    %v268 = vsel %vm231, %v251, %v199
    %v269 = vsel %vm232, %v251, %v200
    %v270 = vsel %vm233, %v251, %v201
    %v271 = vsel %vm234, %v251, %v202
    %v272 = vsel %vm235, %v251, %v203
    %v273 = vsel %vm236, %v251, %v204
    %v274 = vsel %vm237, %v251, %v205
    %v275 = vsel %vm238, %v251, %v206
    %v276 = vsel %vm239, %v251, %v207
    %v277 = vsel %vm240, %v251, %v208
    %v278 = vsel %vm241, %v251, %v209
    %v279 = vsel %vm242, %v251, %v210
    %v280 = vsel %vm243, %v251, %v211
    %v281 = vsel %vm244, %v251, %v212
    %v282 = vsel %vm245, %v251, %v213
    %v283 = vsel %vm246, %v251, %v214
    %vm284 = vcmp.eq.s32.totalorder %v52, 2
    %vm285 = vcmp.eq.s32.totalorder %v55, 2
    %vm286 = vcmp.eq.s32.totalorder %v58, 2
    %vm287 = vcmp.eq.s32.totalorder %v61, 2
    %vm288 = vcmp.eq.s32.totalorder %v64, 2
    %vm289 = vcmp.eq.s32.totalorder %v67, 2
    %vm290 = vcmp.eq.s32.totalorder %v70, 2
    %vm291 = vcmp.eq.s32.totalorder %v73, 2
    %vm292 = vcmp.eq.s32.totalorder %v76, 2
    %vm293 = vcmp.eq.s32.totalorder %v79, 2
    %vm294 = vcmp.eq.s32.totalorder %v82, 2
    %vm295 = vcmp.eq.s32.totalorder %v85, 2
    %vm296 = vcmp.eq.s32.totalorder %v88, 2
    %vm297 = vcmp.eq.s32.totalorder %v91, 2
    %vm298 = vcmp.eq.s32.totalorder %v94, 2
    %vm299 = vcmp.eq.s32.totalorder %v97, 2
    %vm300 = vcmp.eq.s32.totalorder %v100, 2
    %vm301 = vcmp.eq.s32.totalorder %v103, 2
    %vm302 = vcmp.eq.s32.totalorder %v106, 2
    %vm303 = vcmp.eq.s32.totalorder %v109, 2
    %vm304 = vcmp.eq.s32.totalorder %v112, 2
    %vm305 = vcmp.eq.s32.totalorder %v115, 2
    %vm306 = vcmp.eq.s32.totalorder %v118, 2
    %vm307 = vcmp.eq.s32.totalorder %v121, 2
    %vm308 = vcmp.eq.s32.totalorder %v124, 2
    %vm309 = vcmp.eq.s32.totalorder %v127, 2
    %vm310 = vcmp.eq.s32.totalorder %v130, 2
    %vm311 = vcmp.eq.s32.totalorder %v133, 2
    %vm312 = vcmp.eq.s32.totalorder %v136, 2
    %vm313 = vcmp.eq.s32.totalorder %v139, 2
    %vm314 = vcmp.eq.s32.totalorder %v142, 2
    %vm315 = vcmp.eq.s32.totalorder %v145, 2
    %v316 = vld [vmem:[%s3 + $0x2] sm:$0x1]
    %v317 = vlaneseq
    %v318 = vshrl.u32 %v317, 7
    %v319 = vsub.s32 0, %v318
    %v320 = vrot.slane %v316, %v319
    %v321 = vsel %vm284, %v320, %v252
    %v322 = vsel %vm285, %v320, %v253
    %v323 = vsel %vm286, %v320, %v254
    %v324 = vsel %vm287, %v320, %v255
    %v325 = vsel %vm288, %v320, %v256
    %v326 = vsel %vm289, %v320, %v257
    %v327 = vsel %vm290, %v320, %v258
    %v328 = vsel %vm291, %v320, %v259
    %v329 = vsel %vm292, %v320, %v260
    %v330 = vsel %vm293, %v320, %v261
    %v331 = vsel %vm294, %v320, %v262
    %v332 = vsel %vm295, %v320, %v263
    %v333 = vsel %vm296, %v320, %v264
    %v334 = vsel %vm297, %v320, %v265
    %v335 = vsel %vm298, %v320, %v266
    %v336 = vsel %vm299, %v320, %v267
    %v337 = vsel %vm300, %v320, %v268
    %v338 = vsel %vm301, %v320, %v269
    %v339 = vsel %vm302, %v320, %v270
    %v340 = vsel %vm303, %v320, %v271
    %v341 = vsel %vm304, %v320, %v272
    %v342 = vsel %vm305, %v320, %v273
    %v343 = vsel %vm306, %v320, %v274
    %v344 = vsel %vm307, %v320, %v275
    %v345 = vsel %vm308, %v320, %v276
    %v346 = vsel %vm309, %v320, %v277
    %v347 = vsel %vm310, %v320, %v278
    %v348 = vsel %vm311, %v320, %v279
    %v349 = vsel %vm312, %v320, %v280
    %v350 = vsel %vm313, %v320, %v281
    %v351 = vsel %vm314, %v320, %v282
    %v352 = vsel %vm315, %v320, %v283
    %353 = vst [vmem:[#allocation2] sm:$0xff] %v321
    %354 = vst [vmem:[#allocation2 + $0x18] sm:$0xff] %v322
    %355 = vst [vmem:[#allocation2 + $0x30] sm:$0xff] %v323
    %356 = vst [vmem:[#allocation2 + $0x48] sm:$0xff] %v324
    %357 = vst [vmem:[#allocation2 + $0x60] sm:$0xff] %v325
    %358 = vst [vmem:[#allocation2 + $0x78] sm:$0xff] %v326
    %359 = vst [vmem:[#allocation2 + $0x90] sm:$0xff] %v327
    %360 = vst [vmem:[#allocation2 + $0xa8] sm:$0xff] %v328
    %361 = vst [vmem:[#allocation2 + $0xc0] sm:$0xff] %v329
    %362 = vst [vmem:[#allocation2 + $0xd8] sm:$0xff] %v330
    %363 = vst [vmem:[#allocation2 + $0xf0] sm:$0xff] %v331
    %364 = vst [vmem:[#allocation2 + $0x108] sm:$0xff] %v332
    %365 = vst [vmem:[#allocation2 + $0x120] sm:$0xff] %v333
    %366 = vst [vmem:[#allocation2 + $0x138] sm:$0xff] %v334
    %367 = vst [vmem:[#allocation2 + $0x150] sm:$0xff] %v335
    %368 = vst [vmem:[#allocation2 + $0x168] sm:$0xff] %v336
    %369 = vst [vmem:[#allocation2 + $0x180] sm:$0xff] %v337
    %370 = vst [vmem:[#allocation2 + $0x198] sm:$0xff] %v338
    %371 = vst [vmem:[#allocation2 + $0x1b0] sm:$0xff] %v339
    %372 = vst [vmem:[#allocation2 + $0x1c8] sm:$0xff] %v340
    %373 = vst [vmem:[#allocation2 + $0x1e0] sm:$0xff] %v341
    %374 = vst [vmem:[#allocation2 + $0x1f8] sm:$0xff] %v342
    %375 = vst [vmem:[#allocation2 + $0x210] sm:$0xff] %v343
    %376 = vst [vmem:[#allocation2 + $0x228] sm:$0xff] %v344
    %377 = vst [vmem:[#allocation2 + $0x240] sm:$0xff] %v345
    %378 = vst [vmem:[#allocation2 + $0x258] sm:$0xff] %v346
    %379 = vst [vmem:[#allocation2 + $0x270] sm:$0xff] %v347
    %380 = vst [vmem:[#allocation2 + $0x288] sm:$0xff] %v348
    %381 = vst [vmem:[#allocation2 + $0x2a0] sm:$0xff] %v349
    %382 = vst [vmem:[#allocation2 + $0x2b8] sm:$0xff] %v350
    %383 = vst [vmem:[#allocation2 + $0x2d0] sm:$0xff] %v351
    %384 = vst [vmem:[#allocation2 + $0x2e8] sm:$0xff] %v352
    %v385 = vld [vmem:[%s1] sm:$0xff]
    %v386 = vld [vmem:[%s1 + $0x8] sm:$0xff]
    %v387 = vld [vmem:[%s1 + $0x10] sm:$0xff]
    %v388 = vld [vmem:[%s1 + $0x18] sm:$0xff]
    %v389 = vld [vmem:[%s1 + $0x20] sm:$0xff]
    %v390 = vld [vmem:[%s1 + $0x28] sm:$0xff]
    %v391 = vld [vmem:[%s1 + $0x30] sm:$0xff]
    %v392 = vld [vmem:[%s1 + $0x38] sm:$0xff]
    %v393 = vld [vmem:[%s1 + $0x40] sm:$0xff]
    %v394 = vld [vmem:[%s1 + $0x48] sm:$0xff]
    %v395 = vld [vmem:[%s1 + $0x50] sm:$0xff]
    %v396 = vld [vmem:[%s1 + $0x58] sm:$0xff]
    %v397 = vld [vmem:[%s1 + $0x60] sm:$0xff]
    %v398 = vld [vmem:[%s1 + $0x68] sm:$0xff]
    %v399 = vld [vmem:[%s1 + $0x70] sm:$0xff]
    %v400 = vld [vmem:[%s1 + $0x78] sm:$0xff]
    %v401 = vld [vmem:[%s1 + $0x80] sm:$0xff]
    %v402 = vld [vmem:[%s1 + $0x88] sm:$0xff]
    %v403 = vld [vmem:[%s1 + $0x90] sm:$0xff]
    %v404 = vld [vmem:[%s1 + $0x98] sm:$0xff]
    %v405 = vld [vmem:[%s1 + $0xa0] sm:$0xff]
    %v406 = vld [vmem:[%s1 + $0xa8] sm:$0xff]
    %v407 = vld [vmem:[%s1 + $0xb0] sm:$0xff]
    %v408 = vld [vmem:[%s1 + $0xb8] sm:$0xff]
    %v409 = vld [vmem:[%s1 + $0xc0] sm:$0xff]
    %v410 = vld [vmem:[%s1 + $0xc8] sm:$0xff]
    %v411 = vld [vmem:[%s1 + $0xd0] sm:$0xff]
    %v412 = vld [vmem:[%s1 + $0xd8] sm:$0xff]
    %v413 = vld [vmem:[%s1 + $0xe0] sm:$0xff]
    %v414 = vld [vmem:[%s1 + $0xe8] sm:$0xff]
    %v415 = vld [vmem:[%s1 + $0xf0] sm:$0xff]
    %v416 = vld [vmem:[%s1 + $0xf8] sm:$0xff]
    %417 = vset.pattern.permute.xlu0 0
    %418 = vperm.xlu0 %417, %v385
    %v419 = vpop.permute.xlu0 %418
    %420 = vset.pattern.permute.xlu0 0
    %421 = vperm.xlu0 %420, %v386
    %v422 = vpop.permute.xlu0 %421
    %423 = vset.pattern.permute.xlu0 0
    %424 = vperm.xlu0 %423, %v387
    %v425 = vpop.permute.xlu0 %424
    %426 = vset.pattern.permute.xlu0 0
    %427 = vperm.xlu0 %426, %v388
    %v428 = vpop.permute.xlu0 %427
    %429 = vset.pattern.permute.xlu0 0
    %430 = vperm.xlu0 %429, %v389
    %v431 = vpop.permute.xlu0 %430
    %432 = vset.pattern.permute.xlu0 0
    %433 = vperm.xlu0 %432, %v390
    %v434 = vpop.permute.xlu0 %433
    %435 = vset.pattern.permute.xlu0 0
    %436 = vperm.xlu0 %435, %v391
    %v437 = vpop.permute.xlu0 %436
    %438 = vset.pattern.permute.xlu0 0
    %439 = vperm.xlu0 %438, %v392
    %v440 = vpop.permute.xlu0 %439
    %441 = vset.pattern.permute.xlu0 0
    %442 = vperm.xlu0 %441, %v393
    %v443 = vpop.permute.xlu0 %442
    %444 = vset.pattern.permute.xlu0 0
    %445 = vperm.xlu0 %444, %v394
    %v446 = vpop.permute.xlu0 %445
    %447 = vset.pattern.permute.xlu0 0
    %448 = vperm.xlu0 %447, %v395
    %v449 = vpop.permute.xlu0 %448
    %450 = vset.pattern.permute.xlu0 0
    %451 = vperm.xlu0 %450, %v396
    %v452 = vpop.permute.xlu0 %451
    %453 = vset.pattern.permute.xlu0 0
    %454 = vperm.xlu0 %453, %v397
    %v455 = vpop.permute.xlu0 %454
    %456 = vset.pattern.permute.xlu0 0
    %457 = vperm.xlu0 %456, %v398
    %v458 = vpop.permute.xlu0 %457
    %459 = vset.pattern.permute.xlu0 0
    %460 = vperm.xlu0 %459, %v399
    %v461 = vpop.permute.xlu0 %460
    %462 = vset.pattern.permute.xlu0 0
    %463 = vperm.xlu0 %462, %v400
    %v464 = vpop.permute.xlu0 %463
    %465 = vset.pattern.permute.xlu0 0
    %466 = vperm.xlu0 %465, %v401
    %v467 = vpop.permute.xlu0 %466
    %468 = vset.pattern.permute.xlu0 0
    %469 = vperm.xlu0 %468, %v402
    %v470 = vpop.permute.xlu0 %469
    %471 = vset.pattern.permute.xlu0 0
    %472 = vperm.xlu0 %471, %v403
    %v473 = vpop.permute.xlu0 %472
    %474 = vset.pattern.permute.xlu0 0
    %475 = vperm.xlu0 %474, %v404
    %v476 = vpop.permute.xlu0 %475
    %477 = vset.pattern.permute.xlu0 0
    %478 = vperm.xlu0 %477, %v405
    %v479 = vpop.permute.xlu0 %478
    %480 = vset.pattern.permute.xlu0 0
    %481 = vperm.xlu0 %480, %v406
    %v482 = vpop.permute.xlu0 %481
    %483 = vset.pattern.permute.xlu0 0
    %484 = vperm.xlu0 %483, %v407
    %v485 = vpop.permute.xlu0 %484
    %486 = vset.pattern.permute.xlu0 0
    %487 = vperm.xlu0 %486, %v408
    %v488 = vpop.permute.xlu0 %487
    %489 = vset.pattern.permute.xlu0 0
    %490 = vperm.xlu0 %489, %v409
    %v491 = vpop.permute.xlu0 %490
    %492 = vset.pattern.permute.xlu0 0
    %493 = vperm.xlu0 %492, %v410
    %v494 = vpop.permute.xlu0 %493
    %495 = vset.pattern.permute.xlu0 0
    %496 = vperm.xlu0 %495, %v411
    %v497 = vpop.permute.xlu0 %496
    %498 = vset.pattern.permute.xlu0 0
    %499 = vperm.xlu0 %498, %v412
    %v500 = vpop.permute.xlu0 %499
    %501 = vset.pattern.permute.xlu0 0
    %502 = vperm.xlu0 %501, %v413
    %v503 = vpop.permute.xlu0 %502
    %504 = vset.pattern.permute.xlu0 0
    %505 = vperm.xlu0 %504, %v414
    %v506 = vpop.permute.xlu0 %505
    %507 = vset.pattern.permute.xlu0 0
    %508 = vperm.xlu0 %507, %v415
    %v509 = vpop.permute.xlu0 %508
    %510 = vset.pattern.permute.xlu0 0
    %511 = vperm.xlu0 %510, %v416
    %v512 = vpop.permute.xlu0 %511
    %vm513 = vcmp.eq.s32.totalorder %v419, 0
    %vm514 = vcmp.eq.s32.totalorder %v422, 0
    %vm515 = vcmp.eq.s32.totalorder %v425, 0
    %vm516 = vcmp.eq.s32.totalorder %v428, 0
    %vm517 = vcmp.eq.s32.totalorder %v431, 0
    %vm518 = vcmp.eq.s32.totalorder %v434, 0
    %vm519 = vcmp.eq.s32.totalorder %v437, 0
    %vm520 = vcmp.eq.s32.totalorder %v440, 0
    %vm521 = vcmp.eq.s32.totalorder %v443, 0
    %vm522 = vcmp.eq.s32.totalorder %v446, 0
    %vm523 = vcmp.eq.s32.totalorder %v449, 0
    %vm524 = vcmp.eq.s32.totalorder %v452, 0
    %vm525 = vcmp.eq.s32.totalorder %v455, 0
    %vm526 = vcmp.eq.s32.totalorder %v458, 0
    %vm527 = vcmp.eq.s32.totalorder %v461, 0
    %vm528 = vcmp.eq.s32.totalorder %v464, 0
    %vm529 = vcmp.eq.s32.totalorder %v467, 0
    %vm530 = vcmp.eq.s32.totalorder %v470, 0
    %vm531 = vcmp.eq.s32.totalorder %v473, 0
    %vm532 = vcmp.eq.s32.totalorder %v476, 0
    %vm533 = vcmp.eq.s32.totalorder %v479, 0
    %vm534 = vcmp.eq.s32.totalorder %v482, 0
    %vm535 = vcmp.eq.s32.totalorder %v485, 0
    %vm536 = vcmp.eq.s32.totalorder %v488, 0
    %vm537 = vcmp.eq.s32.totalorder %v491, 0
    %vm538 = vcmp.eq.s32.totalorder %v494, 0
    %vm539 = vcmp.eq.s32.totalorder %v497, 0
    %vm540 = vcmp.eq.s32.totalorder %v500, 0
    %vm541 = vcmp.eq.s32.totalorder %v503, 0
    %vm542 = vcmp.eq.s32.totalorder %v506, 0
    %vm543 = vcmp.eq.s32.totalorder %v509, 0
    %vm544 = vcmp.eq.s32.totalorder %v512, 0
    %v545 = vld [vmem:[%s3 + $0x3] sm:$0x1]
    %v546 = vlaneseq
    %v547 = vshrl.u32 %v546, 7
    %v548 = vsub.s32 0, %v547
    %v549 = vrot.slane %v545, %v548
    %v550 = vsel %vm513, %v549, 0.0
    %v551 = vsel %vm514, %v549, 0.0
    %v552 = vsel %vm515, %v549, 0.0
    %v553 = vsel %vm516, %v549, 0.0
    %v554 = vsel %vm517, %v549, 0.0
    %v555 = vsel %vm518, %v549, 0.0
    %v556 = vsel %vm519, %v549, 0.0
    %v557 = vsel %vm520, %v549, 0.0
    %v558 = vsel %vm521, %v549, 0.0
    %v559 = vsel %vm522, %v549, 0.0
    %v560 = vsel %vm523, %v549, 0.0
    %v561 = vsel %vm524, %v549, 0.0
    %v562 = vsel %vm525, %v549, 0.0
    %v563 = vsel %vm526, %v549, 0.0
    %v564 = vsel %vm527, %v549, 0.0
    %v565 = vsel %vm528, %v549, 0.0
    %v566 = vsel %vm529, %v549, 0.0
    %v567 = vsel %vm530, %v549, 0.0
    %v568 = vsel %vm531, %v549, 0.0
    %v569 = vsel %vm532, %v549, 0.0
    %v570 = vsel %vm533, %v549, 0.0
    %v571 = vsel %vm534, %v549, 0.0
    %v572 = vsel %vm535, %v549, 0.0
    %v573 = vsel %vm536, %v549, 0.0
    %v574 = vsel %vm537, %v549, 0.0
    %v575 = vsel %vm538, %v549, 0.0
    %v576 = vsel %vm539, %v549, 0.0
    %v577 = vsel %vm540, %v549, 0.0
    %v578 = vsel %vm541, %v549, 0.0
    %v579 = vsel %vm542, %v549, 0.0
    %v580 = vsel %vm543, %v549, 0.0
    %v581 = vsel %vm544, %v549, 0.0
    %vm582 = vcmp.eq.s32.totalorder %v419, 1
    %vm583 = vcmp.eq.s32.totalorder %v422, 1
    %vm584 = vcmp.eq.s32.totalorder %v425, 1
    %vm585 = vcmp.eq.s32.totalorder %v428, 1
    %vm586 = vcmp.eq.s32.totalorder %v431, 1
    %vm587 = vcmp.eq.s32.totalorder %v434, 1
    %vm588 = vcmp.eq.s32.totalorder %v437, 1
    %vm589 = vcmp.eq.s32.totalorder %v440, 1
    %vm590 = vcmp.eq.s32.totalorder %v443, 1
    %vm591 = vcmp.eq.s32.totalorder %v446, 1
    %vm592 = vcmp.eq.s32.totalorder %v449, 1
    %vm593 = vcmp.eq.s32.totalorder %v452, 1
    %vm594 = vcmp.eq.s32.totalorder %v455, 1
    %vm595 = vcmp.eq.s32.totalorder %v458, 1
    %vm596 = vcmp.eq.s32.totalorder %v461, 1
    %vm597 = vcmp.eq.s32.totalorder %v464, 1
    %vm598 = vcmp.eq.s32.totalorder %v467, 1
    %vm599 = vcmp.eq.s32.totalorder %v470, 1
    %vm600 = vcmp.eq.s32.totalorder %v473, 1
    %vm601 = vcmp.eq.s32.totalorder %v476, 1
    %vm602 = vcmp.eq.s32.totalorder %v479, 1
    %vm603 = vcmp.eq.s32.totalorder %v482, 1
    %vm604 = vcmp.eq.s32.totalorder %v485, 1
    %vm605 = vcmp.eq.s32.totalorder %v488, 1
    %vm606 = vcmp.eq.s32.totalorder %v491, 1
    %vm607 = vcmp.eq.s32.totalorder %v494, 1
    %vm608 = vcmp.eq.s32.totalorder %v497, 1
    %vm609 = vcmp.eq.s32.totalorder %v500, 1
    %vm610 = vcmp.eq.s32.totalorder %v503, 1
    %vm611 = vcmp.eq.s32.totalorder %v506, 1
    %vm612 = vcmp.eq.s32.totalorder %v509, 1
    %vm613 = vcmp.eq.s32.totalorder %v512, 1
    %v614 = vld [vmem:[%s3 + $0x4] sm:$0x1]
    %v615 = vlaneseq
    %v616 = vshrl.u32 %v615, 7
    %v617 = vsub.s32 0, %v616
    %v618 = vrot.slane %v614, %v617
    %v619 = vsel %vm582, %v618, %v550
    %v620 = vsel %vm583, %v618, %v551
    %v621 = vsel %vm584, %v618, %v552
    %v622 = vsel %vm585, %v618, %v553
    %v623 = vsel %vm586, %v618, %v554
    %v624 = vsel %vm587, %v618, %v555
    %v625 = vsel %vm588, %v618, %v556
    %v626 = vsel %vm589, %v618, %v557
    %v627 = vsel %vm590, %v618, %v558
    %v628 = vsel %vm591, %v618, %v559
    %v629 = vsel %vm592, %v618, %v560
    %v630 = vsel %vm593, %v618, %v561
    %v631 = vsel %vm594, %v618, %v562
    %v632 = vsel %vm595, %v618, %v563
    %v633 = vsel %vm596, %v618, %v564
    %v634 = vsel %vm597, %v618, %v565
    %v635 = vsel %vm598, %v618, %v566
    %v636 = vsel %vm599, %v618, %v567
    %v637 = vsel %vm600, %v618, %v568
    %v638 = vsel %vm601, %v618, %v569
    %v639 = vsel %vm602, %v618, %v570
    %v640 = vsel %vm603, %v618, %v571
    %v641 = vsel %vm604, %v618, %v572
    %v642 = vsel %vm605, %v618, %v573
    %v643 = vsel %vm606, %v618, %v574
    %v644 = vsel %vm607, %v618, %v575
    %v645 = vsel %vm608, %v618, %v576
    %v646 = vsel %vm609, %v618, %v577
    %v647 = vsel %vm610, %v618, %v578
    %v648 = vsel %vm611, %v618, %v579
    %v649 = vsel %vm612, %v618, %v580
    %v650 = vsel %vm613, %v618, %v581
    %vm651 = vcmp.eq.s32.totalorder %v419, 2
    %vm652 = vcmp.eq.s32.totalorder %v422, 2
    %vm653 = vcmp.eq.s32.totalorder %v425, 2
    %vm654 = vcmp.eq.s32.totalorder %v428, 2
    %vm655 = vcmp.eq.s32.totalorder %v431, 2
    %vm656 = vcmp.eq.s32.totalorder %v434, 2
    %vm657 = vcmp.eq.s32.totalorder %v437, 2
    %vm658 = vcmp.eq.s32.totalorder %v440, 2
    %vm659 = vcmp.eq.s32.totalorder %v443, 2
    %vm660 = vcmp.eq.s32.totalorder %v446, 2
    %vm661 = vcmp.eq.s32.totalorder %v449, 2
    %vm662 = vcmp.eq.s32.totalorder %v452, 2
    %vm663 = vcmp.eq.s32.totalorder %v455, 2
    %vm664 = vcmp.eq.s32.totalorder %v458, 2
    %vm665 = vcmp.eq.s32.totalorder %v461, 2
    %vm666 = vcmp.eq.s32.totalorder %v464, 2
    %vm667 = vcmp.eq.s32.totalorder %v467, 2
    %vm668 = vcmp.eq.s32.totalorder %v470, 2
    %vm669 = vcmp.eq.s32.totalorder %v473, 2
    %vm670 = vcmp.eq.s32.totalorder %v476, 2
    %vm671 = vcmp.eq.s32.totalorder %v479, 2
    %vm672 = vcmp.eq.s32.totalorder %v482, 2
    %vm673 = vcmp.eq.s32.totalorder %v485, 2
    %vm674 = vcmp.eq.s32.totalorder %v488, 2
    %vm675 = vcmp.eq.s32.totalorder %v491, 2
    %vm676 = vcmp.eq.s32.totalorder %v494, 2
    %vm677 = vcmp.eq.s32.totalorder %v497, 2
    %vm678 = vcmp.eq.s32.totalorder %v500, 2
    %vm679 = vcmp.eq.s32.totalorder %v503, 2
    %vm680 = vcmp.eq.s32.totalorder %v506, 2
    %vm681 = vcmp.eq.s32.totalorder %v509, 2
    %vm682 = vcmp.eq.s32.totalorder %v512, 2
    %v683 = vld [vmem:[%s3 + $0x5] sm:$0x1]
    %v684 = vlaneseq
    %v685 = vshrl.u32 %v684, 7
    %v686 = vsub.s32 0, %v685
    %v687 = vrot.slane %v683, %v686
    %v688 = vsel %vm651, %v687, %v619
    %v689 = vsel %vm652, %v687, %v620
    %v690 = vsel %vm653, %v687, %v621
    %v691 = vsel %vm654, %v687, %v622
    %v692 = vsel %vm655, %v687, %v623
    %v693 = vsel %vm656, %v687, %v624
    %v694 = vsel %vm657, %v687, %v625
    %v695 = vsel %vm658, %v687, %v626
    %v696 = vsel %vm659, %v687, %v627
    %v697 = vsel %vm660, %v687, %v628
    %v698 = vsel %vm661, %v687, %v629
    %v699 = vsel %vm662, %v687, %v630
    %v700 = vsel %vm663, %v687, %v631
    %v701 = vsel %vm664, %v687, %v632
    %v702 = vsel %vm665, %v687, %v633
    %v703 = vsel %vm666, %v687, %v634
    %v704 = vsel %vm667, %v687, %v635
    %v705 = vsel %vm668, %v687, %v636
    %v706 = vsel %vm669, %v687, %v637
    %v707 = vsel %vm670, %v687, %v638
    %v708 = vsel %vm671, %v687, %v639
    %v709 = vsel %vm672, %v687, %v640
    %v710 = vsel %vm673, %v687, %v641
    %v711 = vsel %vm674, %v687, %v642
    %v712 = vsel %vm675, %v687, %v643
    %v713 = vsel %vm676, %v687, %v644
    %v714 = vsel %vm677, %v687, %v645
    %v715 = vsel %vm678, %v687, %v646
    %v716 = vsel %vm679, %v687, %v647
    %v717 = vsel %vm680, %v687, %v648
    %v718 = vsel %vm681, %v687, %v649
    %v719 = vsel %vm682, %v687, %v650
    %720 = vst [vmem:[#allocation2 + $0x8] sm:$0xff] %v688
    %721 = vst [vmem:[#allocation2 + $0x20] sm:$0xff] %v689
    %722 = vst [vmem:[#allocation2 + $0x38] sm:$0xff] %v690
    %723 = vst [vmem:[#allocation2 + $0x50] sm:$0xff] %v691
    %724 = vst [vmem:[#allocation2 + $0x68] sm:$0xff] %v692
    %725 = vst [vmem:[#allocation2 + $0x80] sm:$0xff] %v693
    %726 = vst [vmem:[#allocation2 + $0x98] sm:$0xff] %v694
    %727 = vst [vmem:[#allocation2 + $0xb0] sm:$0xff] %v695
    %728 = vst [vmem:[#allocation2 + $0xc8] sm:$0xff] %v696
    %729 = vst [vmem:[#allocation2 + $0xe0] sm:$0xff] %v697
    %730 = vst [vmem:[#allocation2 + $0xf8] sm:$0xff] %v698
    %731 = vst [vmem:[#allocation2 + $0x110] sm:$0xff] %v699
    %732 = vst [vmem:[#allocation2 + $0x128] sm:$0xff] %v700
    %733 = vst [vmem:[#allocation2 + $0x140] sm:$0xff] %v701
    %734 = vst [vmem:[#allocation2 + $0x158] sm:$0xff] %v702
    %735 = vst [vmem:[#allocation2 + $0x170] sm:$0xff] %v703
    %736 = vst [vmem:[#allocation2 + $0x188] sm:$0xff] %v704
    %737 = vst [vmem:[#allocation2 + $0x1a0] sm:$0xff] %v705
    %738 = vst [vmem:[#allocation2 + $0x1b8] sm:$0xff] %v706
    %739 = vst [vmem:[#allocation2 + $0x1d0] sm:$0xff] %v707
    %740 = vst [vmem:[#allocation2 + $0x1e8] sm:$0xff] %v708
    %741 = vst [vmem:[#allocation2 + $0x200] sm:$0xff] %v709
    %742 = vst [vmem:[#allocation2 + $0x218] sm:$0xff] %v710
    %743 = vst [vmem:[#allocation2 + $0x230] sm:$0xff] %v711
    %744 = vst [vmem:[#allocation2 + $0x248] sm:$0xff] %v712
    %745 = vst [vmem:[#allocation2 + $0x260] sm:$0xff] %v713
    %746 = vst [vmem:[#allocation2 + $0x278] sm:$0xff] %v714
    %747 = vst [vmem:[#allocation2 + $0x290] sm:$0xff] %v715
    %748 = vst [vmem:[#allocation2 + $0x2a8] sm:$0xff] %v716
    %749 = vst [vmem:[#allocation2 + $0x2c0] sm:$0xff] %v717
    %750 = vst [vmem:[#allocation2 + $0x2d8] sm:$0xff] %v718
    %751 = vst [vmem:[#allocation2 + $0x2f0] sm:$0xff] %v719
    %v752 = vld [vmem:[%s2] sm:$0xff]
    %v753 = vld [vmem:[%s2 + $0x8] sm:$0xff]
    %v754 = vld [vmem:[%s2 + $0x10] sm:$0xff]
    %v755 = vld [vmem:[%s2 + $0x18] sm:$0xff]
    %v756 = vld [vmem:[%s2 + $0x20] sm:$0xff]
    %v757 = vld [vmem:[%s2 + $0x28] sm:$0xff]
    %v758 = vld [vmem:[%s2 + $0x30] sm:$0xff]
    %v759 = vld [vmem:[%s2 + $0x38] sm:$0xff]
    %v760 = vld [vmem:[%s2 + $0x40] sm:$0xff]
    %v761 = vld [vmem:[%s2 + $0x48] sm:$0xff]
    %v762 = vld [vmem:[%s2 + $0x50] sm:$0xff]
    %v763 = vld [vmem:[%s2 + $0x58] sm:$0xff]
    %v764 = vld [vmem:[%s2 + $0x60] sm:$0xff]
    %v765 = vld [vmem:[%s2 + $0x68] sm:$0xff]
    %v766 = vld [vmem:[%s2 + $0x70] sm:$0xff]
    %v767 = vld [vmem:[%s2 + $0x78] sm:$0xff]
    %v768 = vld [vmem:[%s2 + $0x80] sm:$0xff]
    %v769 = vld [vmem:[%s2 + $0x88] sm:$0xff]
    %v770 = vld [vmem:[%s2 + $0x90] sm:$0xff]
    %v771 = vld [vmem:[%s2 + $0x98] sm:$0xff]
    %v772 = vld [vmem:[%s2 + $0xa0] sm:$0xff]
    %v773 = vld [vmem:[%s2 + $0xa8] sm:$0xff]
    %v774 = vld [vmem:[%s2 + $0xb0] sm:$0xff]
    %v775 = vld [vmem:[%s2 + $0xb8] sm:$0xff]
    %v776 = vld [vmem:[%s2 + $0xc0] sm:$0xff]
    %v777 = vld [vmem:[%s2 + $0xc8] sm:$0xff]
    %v778 = vld [vmem:[%s2 + $0xd0] sm:$0xff]
    %v779 = vld [vmem:[%s2 + $0xd8] sm:$0xff]
    %v780 = vld [vmem:[%s2 + $0xe0] sm:$0xff]
    %v781 = vld [vmem:[%s2 + $0xe8] sm:$0xff]
    %v782 = vld [vmem:[%s2 + $0xf0] sm:$0xff]
    %v783 = vld [vmem:[%s2 + $0xf8] sm:$0xff]
    %784 = vset.pattern.permute.xlu0 0
    %785 = vperm.xlu0 %784, %v752
    %v786 = vpop.permute.xlu0 %785
    %787 = vset.pattern.permute.xlu0 0
    %788 = vperm.xlu0 %787, %v753
    %v789 = vpop.permute.xlu0 %788
    %790 = vset.pattern.permute.xlu0 0
    %791 = vperm.xlu0 %790, %v754
    %v792 = vpop.permute.xlu0 %791
    %793 = vset.pattern.permute.xlu0 0
    %794 = vperm.xlu0 %793, %v755
    %v795 = vpop.permute.xlu0 %794
    %796 = vset.pattern.permute.xlu0 0
    %797 = vperm.xlu0 %796, %v756
    %v798 = vpop.permute.xlu0 %797
    %799 = vset.pattern.permute.xlu0 0
    %800 = vperm.xlu0 %799, %v757
    %v801 = vpop.permute.xlu0 %800
    %802 = vset.pattern.permute.xlu0 0
    %803 = vperm.xlu0 %802, %v758
    %v804 = vpop.permute.xlu0 %803
    %805 = vset.pattern.permute.xlu0 0
    %806 = vperm.xlu0 %805, %v759
    %v807 = vpop.permute.xlu0 %806
    %808 = vset.pattern.permute.xlu0 0
    %809 = vperm.xlu0 %808, %v760
    %v810 = vpop.permute.xlu0 %809
    %811 = vset.pattern.permute.xlu0 0
    %812 = vperm.xlu0 %811, %v761
    %v813 = vpop.permute.xlu0 %812
    %814 = vset.pattern.permute.xlu0 0
    %815 = vperm.xlu0 %814, %v762
    %v816 = vpop.permute.xlu0 %815
    %817 = vset.pattern.permute.xlu0 0
    %818 = vperm.xlu0 %817, %v763
    %v819 = vpop.permute.xlu0 %818
    %820 = vset.pattern.permute.xlu0 0
    %821 = vperm.xlu0 %820, %v764
    %v822 = vpop.permute.xlu0 %821
    %823 = vset.pattern.permute.xlu0 0
    %824 = vperm.xlu0 %823, %v765
    %v825 = vpop.permute.xlu0 %824
    %826 = vset.pattern.permute.xlu0 0
    %827 = vperm.xlu0 %826, %v766
    %v828 = vpop.permute.xlu0 %827
    %829 = vset.pattern.permute.xlu0 0
    %830 = vperm.xlu0 %829, %v767
    %v831 = vpop.permute.xlu0 %830
    %832 = vset.pattern.permute.xlu0 0
    %833 = vperm.xlu0 %832, %v768
    %v834 = vpop.permute.xlu0 %833
    %835 = vset.pattern.permute.xlu0 0
    %836 = vperm.xlu0 %835, %v769
    %v837 = vpop.permute.xlu0 %836
    %838 = vset.pattern.permute.xlu0 0
    %839 = vperm.xlu0 %838, %v770
    %v840 = vpop.permute.xlu0 %839
    %841 = vset.pattern.permute.xlu0 0
    %842 = vperm.xlu0 %841, %v771
    %v843 = vpop.permute.xlu0 %842
    %844 = vset.pattern.permute.xlu0 0
    %845 = vperm.xlu0 %844, %v772
    %v846 = vpop.permute.xlu0 %845
    %847 = vset.pattern.permute.xlu0 0
    %848 = vperm.xlu0 %847, %v773
    %v849 = vpop.permute.xlu0 %848
    %850 = vset.pattern.permute.xlu0 0
    %851 = vperm.xlu0 %850, %v774
    %v852 = vpop.permute.xlu0 %851
    %853 = vset.pattern.permute.xlu0 0
    %854 = vperm.xlu0 %853, %v775
    %v855 = vpop.permute.xlu0 %854
    %856 = vset.pattern.permute.xlu0 0
    %857 = vperm.xlu0 %856, %v776
    %v858 = vpop.permute.xlu0 %857
    %859 = vset.pattern.permute.xlu0 0
    %860 = vperm.xlu0 %859, %v777
    %v861 = vpop.permute.xlu0 %860
    %862 = vset.pattern.permute.xlu0 0
    %863 = vperm.xlu0 %862, %v778
    %v864 = vpop.permute.xlu0 %863
    %865 = vset.pattern.permute.xlu0 0
    %866 = vperm.xlu0 %865, %v779
    %v867 = vpop.permute.xlu0 %866
    %868 = vset.pattern.permute.xlu0 0
    %869 = vperm.xlu0 %868, %v780
    %v870 = vpop.permute.xlu0 %869
    %871 = vset.pattern.permute.xlu0 0
    %872 = vperm.xlu0 %871, %v781
    %v873 = vpop.permute.xlu0 %872
    %874 = vset.pattern.permute.xlu0 0
    %875 = vperm.xlu0 %874, %v782
    %v876 = vpop.permute.xlu0 %875
    %877 = vset.pattern.permute.xlu0 0
    %878 = vperm.xlu0 %877, %v783
    %v879 = vpop.permute.xlu0 %878
    %vm880 = vcmp.eq.s32.totalorder %v786, 0
    %vm881 = vcmp.eq.s32.totalorder %v789, 0
    %vm882 = vcmp.eq.s32.totalorder %v792, 0
    %vm883 = vcmp.eq.s32.totalorder %v795, 0
    %vm884 = vcmp.eq.s32.totalorder %v798, 0
    %vm885 = vcmp.eq.s32.totalorder %v801, 0
    %vm886 = vcmp.eq.s32.totalorder %v804, 0
    %vm887 = vcmp.eq.s32.totalorder %v807, 0
    %vm888 = vcmp.eq.s32.totalorder %v810, 0
    %vm889 = vcmp.eq.s32.totalorder %v813, 0
    %vm890 = vcmp.eq.s32.totalorder %v816, 0
    %vm891 = vcmp.eq.s32.totalorder %v819, 0
    %vm892 = vcmp.eq.s32.totalorder %v822, 0
    %vm893 = vcmp.eq.s32.totalorder %v825, 0
    %vm894 = vcmp.eq.s32.totalorder %v828, 0
    %vm895 = vcmp.eq.s32.totalorder %v831, 0
    %vm896 = vcmp.eq.s32.totalorder %v834, 0
    %vm897 = vcmp.eq.s32.totalorder %v837, 0
    %vm898 = vcmp.eq.s32.totalorder %v840, 0
    %vm899 = vcmp.eq.s32.totalorder %v843, 0
    %vm900 = vcmp.eq.s32.totalorder %v846, 0
    %vm901 = vcmp.eq.s32.totalorder %v849, 0
    %vm902 = vcmp.eq.s32.totalorder %v852, 0
    %vm903 = vcmp.eq.s32.totalorder %v855, 0
    %vm904 = vcmp.eq.s32.totalorder %v858, 0
    %vm905 = vcmp.eq.s32.totalorder %v861, 0
    %vm906 = vcmp.eq.s32.totalorder %v864, 0
    %vm907 = vcmp.eq.s32.totalorder %v867, 0
    %vm908 = vcmp.eq.s32.totalorder %v870, 0
    %vm909 = vcmp.eq.s32.totalorder %v873, 0
    %vm910 = vcmp.eq.s32.totalorder %v876, 0
    %vm911 = vcmp.eq.s32.totalorder %v879, 0
    %v912 = vld [vmem:[%s3 + $0x6] sm:$0x1]
    %v913 = vlaneseq
    %v914 = vshrl.u32 %v913, 7
    %v915 = vsub.s32 0, %v914
    %v916 = vrot.slane %v912, %v915
    %v917 = vsel %vm880, %v916, 0.0
    %v918 = vsel %vm881, %v916, 0.0
    %v919 = vsel %vm882, %v916, 0.0
    %v920 = vsel %vm883, %v916, 0.0
    %v921 = vsel %vm884, %v916, 0.0
    %v922 = vsel %vm885, %v916, 0.0
    %v923 = vsel %vm886, %v916, 0.0
    %v924 = vsel %vm887, %v916, 0.0
    %v925 = vsel %vm888, %v916, 0.0
    %v926 = vsel %vm889, %v916, 0.0
    %v927 = vsel %vm890, %v916, 0.0
    %v928 = vsel %vm891, %v916, 0.0
    %v929 = vsel %vm892, %v916, 0.0
    %v930 = vsel %vm893, %v916, 0.0
    %v931 = vsel %vm894, %v916, 0.0
    %v932 = vsel %vm895, %v916, 0.0
    %v933 = vsel %vm896, %v916, 0.0
    %v934 = vsel %vm897, %v916, 0.0
    %v935 = vsel %vm898, %v916, 0.0
    %v936 = vsel %vm899, %v916, 0.0
    %v937 = vsel %vm900, %v916, 0.0
    %v938 = vsel %vm901, %v916, 0.0
    %v939 = vsel %vm902, %v916, 0.0
    %v940 = vsel %vm903, %v916, 0.0
    %v941 = vsel %vm904, %v916, 0.0
    %v942 = vsel %vm905, %v916, 0.0
    %v943 = vsel %vm906, %v916, 0.0
    %v944 = vsel %vm907, %v916, 0.0
    %v945 = vsel %vm908, %v916, 0.0
    %v946 = vsel %vm909, %v916, 0.0
    %v947 = vsel %vm910, %v916, 0.0
    %v948 = vsel %vm911, %v916, 0.0
    %vm949 = vcmp.eq.s32.totalorder %v786, 1
    %vm950 = vcmp.eq.s32.totalorder %v789, 1
    %vm951 = vcmp.eq.s32.totalorder %v792, 1
    %vm952 = vcmp.eq.s32.totalorder %v795, 1
    %vm953 = vcmp.eq.s32.totalorder %v798, 1
    %vm954 = vcmp.eq.s32.totalorder %v801, 1
    %vm955 = vcmp.eq.s32.totalorder %v804, 1
    %vm956 = vcmp.eq.s32.totalorder %v807, 1
    %vm957 = vcmp.eq.s32.totalorder %v810, 1
    %vm958 = vcmp.eq.s32.totalorder %v813, 1
    %vm959 = vcmp.eq.s32.totalorder %v816, 1
    %vm960 = vcmp.eq.s32.totalorder %v819, 1
    %vm961 = vcmp.eq.s32.totalorder %v822, 1
    %vm962 = vcmp.eq.s32.totalorder %v825, 1
    %vm963 = vcmp.eq.s32.totalorder %v828, 1
    %vm964 = vcmp.eq.s32.totalorder %v831, 1
    %vm965 = vcmp.eq.s32.totalorder %v834, 1
    %vm966 = vcmp.eq.s32.totalorder %v837, 1
    %vm967 = vcmp.eq.s32.totalorder %v840, 1
    %vm968 = vcmp.eq.s32.totalorder %v843, 1
    %vm969 = vcmp.eq.s32.totalorder %v846, 1
    %vm970 = vcmp.eq.s32.totalorder %v849, 1
    %vm971 = vcmp.eq.s32.totalorder %v852, 1
    %vm972 = vcmp.eq.s32.totalorder %v855, 1
    %vm973 = vcmp.eq.s32.totalorder %v858, 1
    %vm974 = vcmp.eq.s32.totalorder %v861, 1
    %vm975 = vcmp.eq.s32.totalorder %v864, 1
    %vm976 = vcmp.eq.s32.totalorder %v867, 1
    %vm977 = vcmp.eq.s32.totalorder %v870, 1
    %vm978 = vcmp.eq.s32.totalorder %v873, 1
    %vm979 = vcmp.eq.s32.totalorder %v876, 1
    %vm980 = vcmp.eq.s32.totalorder %v879, 1
    %v981 = vld [vmem:[%s3 + $0x7] sm:$0x1]
    %v982 = vlaneseq
    %v983 = vshrl.u32 %v982, 7
    %v984 = vsub.s32 0, %v983
    %v985 = vrot.slane %v981, %v984
    %v986 = vsel %vm949, %v985, %v917
    %v987 = vsel %vm950, %v985, %v918
    %v988 = vsel %vm951, %v985, %v919
    %v989 = vsel %vm952, %v985, %v920
    %v990 = vsel %vm953, %v985, %v921
    %v991 = vsel %vm954, %v985, %v922
    %v992 = vsel %vm955, %v985, %v923
    %v993 = vsel %vm956, %v985, %v924
    %v994 = vsel %vm957, %v985, %v925
    %v995 = vsel %vm958, %v985, %v926
    %v996 = vsel %vm959, %v985, %v927
    %v997 = vsel %vm960, %v985, %v928
    %v998 = vsel %vm961, %v985, %v929
    %v999 = vsel %vm962, %v985, %v930
    %v1000 = vsel %vm963, %v985, %v931
    %v1001 = vsel %vm964, %v985, %v932
    %v1002 = vsel %vm965, %v985, %v933
    %v1003 = vsel %vm966, %v985, %v934
    %v1004 = vsel %vm967, %v985, %v935
    %v1005 = vsel %vm968, %v985, %v936
    %v1006 = vsel %vm969, %v985, %v937
    %v1007 = vsel %vm970, %v985, %v938
    %v1008 = vsel %vm971, %v985, %v939
    %v1009 = vsel %vm972, %v985, %v940
    %v1010 = vsel %vm973, %v985, %v941
    %v1011 = vsel %vm974, %v985, %v942
    %v1012 = vsel %vm975, %v985, %v943
    %v1013 = vsel %vm976, %v985, %v944
    %v1014 = vsel %vm977, %v985, %v945
    %v1015 = vsel %vm978, %v985, %v946
    %v1016 = vsel %vm979, %v985, %v947
    %v1017 = vsel %vm980, %v985, %v948
    %vm1018 = vcmp.eq.s32.totalorder %v786, 2
    %vm1019 = vcmp.eq.s32.totalorder %v789, 2
    %vm1020 = vcmp.eq.s32.totalorder %v792, 2
    %vm1021 = vcmp.eq.s32.totalorder %v795, 2
    %vm1022 = vcmp.eq.s32.totalorder %v798, 2
    %vm1023 = vcmp.eq.s32.totalorder %v801, 2
    %vm1024 = vcmp.eq.s32.totalorder %v804, 2
    %vm1025 = vcmp.eq.s32.totalorder %v807, 2
    %vm1026 = vcmp.eq.s32.totalorder %v810, 2
    %vm1027 = vcmp.eq.s32.totalorder %v813, 2
    %vm1028 = vcmp.eq.s32.totalorder %v816, 2
    %vm1029 = vcmp.eq.s32.totalorder %v819, 2
    %vm1030 = vcmp.eq.s32.totalorder %v822, 2
    %vm1031 = vcmp.eq.s32.totalorder %v825, 2
    %vm1032 = vcmp.eq.s32.totalorder %v828, 2
    %vm1033 = vcmp.eq.s32.totalorder %v831, 2
    %vm1034 = vcmp.eq.s32.totalorder %v834, 2
    %vm1035 = vcmp.eq.s32.totalorder %v837, 2
    %vm1036 = vcmp.eq.s32.totalorder %v840, 2
    %vm1037 = vcmp.eq.s32.totalorder %v843, 2
    %vm1038 = vcmp.eq.s32.totalorder %v846, 2
    %vm1039 = vcmp.eq.s32.totalorder %v849, 2
    %vm1040 = vcmp.eq.s32.totalorder %v852, 2
    %vm1041 = vcmp.eq.s32.totalorder %v855, 2
    %vm1042 = vcmp.eq.s32.totalorder %v858, 2
    %vm1043 = vcmp.eq.s32.totalorder %v861, 2
    %vm1044 = vcmp.eq.s32.totalorder %v864, 2
    %vm1045 = vcmp.eq.s32.totalorder %v867, 2
    %vm1046 = vcmp.eq.s32.totalorder %v870, 2
    %vm1047 = vcmp.eq.s32.totalorder %v873, 2
    %vm1048 = vcmp.eq.s32.totalorder %v876, 2
    %vm1049 = vcmp.eq.s32.totalorder %v879, 2
    %v1050 = vld [vmem:[%s3 + $0x8] sm:$0x1]
    %v1051 = vlaneseq
    %v1052 = vshrl.u32 %v1051, 7
    %v1053 = vsub.s32 0, %v1052
    %v1054 = vrot.slane %v1050, %v1053
    %v1055 = vsel %vm1018, %v1054, %v986
    %v1056 = vsel %vm1019, %v1054, %v987
    %v1057 = vsel %vm1020, %v1054, %v988
    %v1058 = vsel %vm1021, %v1054, %v989
    %v1059 = vsel %vm1022, %v1054, %v990
    %v1060 = vsel %vm1023, %v1054, %v991
    %v1061 = vsel %vm1024, %v1054, %v992
    %v1062 = vsel %vm1025, %v1054, %v993
    %v1063 = vsel %vm1026, %v1054, %v994
    %v1064 = vsel %vm1027, %v1054, %v995
    %v1065 = vsel %vm1028, %v1054, %v996
    %v1066 = vsel %vm1029, %v1054, %v997
    %v1067 = vsel %vm1030, %v1054, %v998
    %v1068 = vsel %vm1031, %v1054, %v999
    %v1069 = vsel %vm1032, %v1054, %v1000
    %v1070 = vsel %vm1033, %v1054, %v1001
    %v1071 = vsel %vm1034, %v1054, %v1002
    %v1072 = vsel %vm1035, %v1054, %v1003
    %v1073 = vsel %vm1036, %v1054, %v1004
    %v1074 = vsel %vm1037, %v1054, %v1005
    %v1075 = vsel %vm1038, %v1054, %v1006
    %v1076 = vsel %vm1039, %v1054, %v1007
    %v1077 = vsel %vm1040, %v1054, %v1008
    %v1078 = vsel %vm1041, %v1054, %v1009
    %v1079 = vsel %vm1042, %v1054, %v1010
    %v1080 = vsel %vm1043, %v1054, %v1011
    %v1081 = vsel %vm1044, %v1054, %v1012
    %v1082 = vsel %vm1045, %v1054, %v1013
    %v1083 = vsel %vm1046, %v1054, %v1014
    %v1084 = vsel %vm1047, %v1054, %v1015
    %v1085 = vsel %vm1048, %v1054, %v1016
    %v1086 = vsel %vm1049, %v1054, %v1017
    %vm1087 = vcmp.eq.s32.totalorder %v786, 3
    %vm1088 = vcmp.eq.s32.totalorder %v789, 3
    %vm1089 = vcmp.eq.s32.totalorder %v792, 3
    %vm1090 = vcmp.eq.s32.totalorder %v795, 3
    %vm1091 = vcmp.eq.s32.totalorder %v798, 3
    %vm1092 = vcmp.eq.s32.totalorder %v801, 3
    %vm1093 = vcmp.eq.s32.totalorder %v804, 3
    %vm1094 = vcmp.eq.s32.totalorder %v807, 3
    %vm1095 = vcmp.eq.s32.totalorder %v810, 3
    %vm1096 = vcmp.eq.s32.totalorder %v813, 3
    %vm1097 = vcmp.eq.s32.totalorder %v816, 3
    %vm1098 = vcmp.eq.s32.totalorder %v819, 3
    %vm1099 = vcmp.eq.s32.totalorder %v822, 3
    %vm1100 = vcmp.eq.s32.totalorder %v825, 3
    %vm1101 = vcmp.eq.s32.totalorder %v828, 3
    %vm1102 = vcmp.eq.s32.totalorder %v831, 3
    %vm1103 = vcmp.eq.s32.totalorder %v834, 3
    %vm1104 = vcmp.eq.s32.totalorder %v837, 3
    %vm1105 = vcmp.eq.s32.totalorder %v840, 3
    %vm1106 = vcmp.eq.s32.totalorder %v843, 3
    %vm1107 = vcmp.eq.s32.totalorder %v846, 3
    %vm1108 = vcmp.eq.s32.totalorder %v849, 3
    %vm1109 = vcmp.eq.s32.totalorder %v852, 3
    %vm1110 = vcmp.eq.s32.totalorder %v855, 3
    %vm1111 = vcmp.eq.s32.totalorder %v858, 3
    %vm1112 = vcmp.eq.s32.totalorder %v861, 3
    %vm1113 = vcmp.eq.s32.totalorder %v864, 3
    %vm1114 = vcmp.eq.s32.totalorder %v867, 3
    %vm1115 = vcmp.eq.s32.totalorder %v870, 3
    %vm1116 = vcmp.eq.s32.totalorder %v873, 3
    %vm1117 = vcmp.eq.s32.totalorder %v876, 3
    %vm1118 = vcmp.eq.s32.totalorder %v879, 3
    %v1119 = vld [vmem:[%s3 + $0x9] sm:$0x1]
    %v1120 = vlaneseq
    %v1121 = vshrl.u32 %v1120, 7
    %v1122 = vsub.s32 0, %v1121
    %v1123 = vrot.slane %v1119, %v1122
    %v1124 = vsel %vm1087, %v1123, %v1055
    %v1125 = vsel %vm1088, %v1123, %v1056
    %v1126 = vsel %vm1089, %v1123, %v1057
    %v1127 = vsel %vm1090, %v1123, %v1058
    %v1128 = vsel %vm1091, %v1123, %v1059
    %v1129 = vsel %vm1092, %v1123, %v1060
    %v1130 = vsel %vm1093, %v1123, %v1061
    %v1131 = vsel %vm1094, %v1123, %v1062
    %v1132 = vsel %vm1095, %v1123, %v1063
    %v1133 = vsel %vm1096, %v1123, %v1064
    %v1134 = vsel %vm1097, %v1123, %v1065
    %v1135 = vsel %vm1098, %v1123, %v1066
    %v1136 = vsel %vm1099, %v1123, %v1067
    %v1137 = vsel %vm1100, %v1123, %v1068
    %v1138 = vsel %vm1101, %v1123, %v1069
    %v1139 = vsel %vm1102, %v1123, %v1070
    %v1140 = vsel %vm1103, %v1123, %v1071
    %v1141 = vsel %vm1104, %v1123, %v1072
    %v1142 = vsel %vm1105, %v1123, %v1073
    %v1143 = vsel %vm1106, %v1123, %v1074
    %v1144 = vsel %vm1107, %v1123, %v1075
    %v1145 = vsel %vm1108, %v1123, %v1076
    %v1146 = vsel %vm1109, %v1123, %v1077
    %v1147 = vsel %vm1110, %v1123, %v1078
    %v1148 = vsel %vm1111, %v1123, %v1079
    %v1149 = vsel %vm1112, %v1123, %v1080
    %v1150 = vsel %vm1113, %v1123, %v1081
    %v1151 = vsel %vm1114, %v1123, %v1082
    %v1152 = vsel %vm1115, %v1123, %v1083
    %v1153 = vsel %vm1116, %v1123, %v1084
    %v1154 = vsel %vm1117, %v1123, %v1085
    %v1155 = vsel %vm1118, %v1123, %v1086
    %vm1156 = vcmp.eq.s32.totalorder %v786, 4
    %vm1157 = vcmp.eq.s32.totalorder %v789, 4
    %vm1158 = vcmp.eq.s32.totalorder %v792, 4
    %vm1159 = vcmp.eq.s32.totalorder %v795, 4
    %vm1160 = vcmp.eq.s32.totalorder %v798, 4
    %vm1161 = vcmp.eq.s32.totalorder %v801, 4
    %vm1162 = vcmp.eq.s32.totalorder %v804, 4
    %vm1163 = vcmp.eq.s32.totalorder %v807, 4
    %vm1164 = vcmp.eq.s32.totalorder %v810, 4
    %vm1165 = vcmp.eq.s32.totalorder %v813, 4
    %vm1166 = vcmp.eq.s32.totalorder %v816, 4
    %vm1167 = vcmp.eq.s32.totalorder %v819, 4
    %vm1168 = vcmp.eq.s32.totalorder %v822, 4
    %vm1169 = vcmp.eq.s32.totalorder %v825, 4
    %vm1170 = vcmp.eq.s32.totalorder %v828, 4
    %vm1171 = vcmp.eq.s32.totalorder %v831, 4
    %vm1172 = vcmp.eq.s32.totalorder %v834, 4
    %vm1173 = vcmp.eq.s32.totalorder %v837, 4
    %vm1174 = vcmp.eq.s32.totalorder %v840, 4
    %vm1175 = vcmp.eq.s32.totalorder %v843, 4
    %vm1176 = vcmp.eq.s32.totalorder %v846, 4
    %vm1177 = vcmp.eq.s32.totalorder %v849, 4
    %vm1178 = vcmp.eq.s32.totalorder %v852, 4
    %vm1179 = vcmp.eq.s32.totalorder %v855, 4
    %vm1180 = vcmp.eq.s32.totalorder %v858, 4
    %vm1181 = vcmp.eq.s32.totalorder %v861, 4
    %vm1182 = vcmp.eq.s32.totalorder %v864, 4
    %vm1183 = vcmp.eq.s32.totalorder %v867, 4
    %vm1184 = vcmp.eq.s32.totalorder %v870, 4
    %vm1185 = vcmp.eq.s32.totalorder %v873, 4
    %vm1186 = vcmp.eq.s32.totalorder %v876, 4
    %vm1187 = vcmp.eq.s32.totalorder %v879, 4
    %v1188 = vld [vmem:[%s3 + $0xa] sm:$0x1]
    %v1189 = vlaneseq
    %v1190 = vshrl.u32 %v1189, 7
    %v1191 = vsub.s32 0, %v1190
    %v1192 = vrot.slane %v1188, %v1191
    %v1193 = vsel %vm1156, %v1192, %v1124
    %v1194 = vsel %vm1157, %v1192, %v1125
    %v1195 = vsel %vm1158, %v1192, %v1126
    %v1196 = vsel %vm1159, %v1192, %v1127
    %v1197 = vsel %vm1160, %v1192, %v1128
    %v1198 = vsel %vm1161, %v1192, %v1129
    %v1199 = vsel %vm1162, %v1192, %v1130
    %v1200 = vsel %vm1163, %v1192, %v1131
    %v1201 = vsel %vm1164, %v1192, %v1132
    %v1202 = vsel %vm1165, %v1192, %v1133
    %v1203 = vsel %vm1166, %v1192, %v1134
    %v1204 = vsel %vm1167, %v1192, %v1135
    %v1205 = vsel %vm1168, %v1192, %v1136
    %v1206 = vsel %vm1169, %v1192, %v1137
    %v1207 = vsel %vm1170, %v1192, %v1138
    %v1208 = vsel %vm1171, %v1192, %v1139
    %v1209 = vsel %vm1172, %v1192, %v1140
    %v1210 = vsel %vm1173, %v1192, %v1141
    %v1211 = vsel %vm1174, %v1192, %v1142
    %v1212 = vsel %vm1175, %v1192, %v1143
    %v1213 = vsel %vm1176, %v1192, %v1144
    %v1214 = vsel %vm1177, %v1192, %v1145
    %v1215 = vsel %vm1178, %v1192, %v1146
    %v1216 = vsel %vm1179, %v1192, %v1147
    %v1217 = vsel %vm1180, %v1192, %v1148
    %v1218 = vsel %vm1181, %v1192, %v1149
    %v1219 = vsel %vm1182, %v1192, %v1150
    %v1220 = vsel %vm1183, %v1192, %v1151
    %v1221 = vsel %vm1184, %v1192, %v1152
    %v1222 = vsel %vm1185, %v1192, %v1153
    %v1223 = vsel %vm1186, %v1192, %v1154
    %v1224 = vsel %vm1187, %v1192, %v1155
    %vm1225 = vcmp.eq.s32.totalorder %v786, 5
    %vm1226 = vcmp.eq.s32.totalorder %v789, 5
    %vm1227 = vcmp.eq.s32.totalorder %v792, 5
    %vm1228 = vcmp.eq.s32.totalorder %v795, 5
    %vm1229 = vcmp.eq.s32.totalorder %v798, 5
    %vm1230 = vcmp.eq.s32.totalorder %v801, 5
    %vm1231 = vcmp.eq.s32.totalorder %v804, 5
    %vm1232 = vcmp.eq.s32.totalorder %v807, 5
    %vm1233 = vcmp.eq.s32.totalorder %v810, 5
    %vm1234 = vcmp.eq.s32.totalorder %v813, 5
    %vm1235 = vcmp.eq.s32.totalorder %v816, 5
    %vm1236 = vcmp.eq.s32.totalorder %v819, 5
    %vm1237 = vcmp.eq.s32.totalorder %v822, 5
    %vm1238 = vcmp.eq.s32.totalorder %v825, 5
    %vm1239 = vcmp.eq.s32.totalorder %v828, 5
    %vm1240 = vcmp.eq.s32.totalorder %v831, 5
    %vm1241 = vcmp.eq.s32.totalorder %v834, 5
    %vm1242 = vcmp.eq.s32.totalorder %v837, 5
    %vm1243 = vcmp.eq.s32.totalorder %v840, 5
    %vm1244 = vcmp.eq.s32.totalorder %v843, 5
    %vm1245 = vcmp.eq.s32.totalorder %v846, 5
    %vm1246 = vcmp.eq.s32.totalorder %v849, 5
    %vm1247 = vcmp.eq.s32.totalorder %v852, 5
    %vm1248 = vcmp.eq.s32.totalorder %v855, 5
    %vm1249 = vcmp.eq.s32.totalorder %v858, 5
    %vm1250 = vcmp.eq.s32.totalorder %v861, 5
    %vm1251 = vcmp.eq.s32.totalorder %v864, 5
    %vm1252 = vcmp.eq.s32.totalorder %v867, 5
    %vm1253 = vcmp.eq.s32.totalorder %v870, 5
    %vm1254 = vcmp.eq.s32.totalorder %v873, 5
    %vm1255 = vcmp.eq.s32.totalorder %v876, 5
    %vm1256 = vcmp.eq.s32.totalorder %v879, 5
    %v1257 = vld [vmem:[%s3 + $0xb] sm:$0x1]
    %v1258 = vlaneseq
    %v1259 = vshrl.u32 %v1258, 7
    %v1260 = vsub.s32 0, %v1259
    %v1261 = vrot.slane %v1257, %v1260
    %v1262 = vsel %vm1225, %v1261, %v1193
    %v1263 = vsel %vm1226, %v1261, %v1194
    %v1264 = vsel %vm1227, %v1261, %v1195
    %v1265 = vsel %vm1228, %v1261, %v1196
    %v1266 = vsel %vm1229, %v1261, %v1197
    %v1267 = vsel %vm1230, %v1261, %v1198
    %v1268 = vsel %vm1231, %v1261, %v1199
    %v1269 = vsel %vm1232, %v1261, %v1200
    %v1270 = vsel %vm1233, %v1261, %v1201
    %v1271 = vsel %vm1234, %v1261, %v1202
    %v1272 = vsel %vm1235, %v1261, %v1203
    %v1273 = vsel %vm1236, %v1261, %v1204
    %v1274 = vsel %vm1237, %v1261, %v1205
    %v1275 = vsel %vm1238, %v1261, %v1206
    %v1276 = vsel %vm1239, %v1261, %v1207
    %v1277 = vsel %vm1240, %v1261, %v1208
    %v1278 = vsel %vm1241, %v1261, %v1209
    %v1279 = vsel %vm1242, %v1261, %v1210
    %v1280 = vsel %vm1243, %v1261, %v1211
    %v1281 = vsel %vm1244, %v1261, %v1212
    %v1282 = vsel %vm1245, %v1261, %v1213
    %v1283 = vsel %vm1246, %v1261, %v1214
    %v1284 = vsel %vm1247, %v1261, %v1215
    %v1285 = vsel %vm1248, %v1261, %v1216
    %v1286 = vsel %vm1249, %v1261, %v1217
    %v1287 = vsel %vm1250, %v1261, %v1218
    %v1288 = vsel %vm1251, %v1261, %v1219
    %v1289 = vsel %vm1252, %v1261, %v1220
    %v1290 = vsel %vm1253, %v1261, %v1221
    %v1291 = vsel %vm1254, %v1261, %v1222
    %v1292 = vsel %vm1255, %v1261, %v1223
    %v1293 = vsel %vm1256, %v1261, %v1224
    %vm1294 = vcmp.eq.s32.totalorder %v786, 6
    %vm1295 = vcmp.eq.s32.totalorder %v789, 6
    %vm1296 = vcmp.eq.s32.totalorder %v792, 6
    %vm1297 = vcmp.eq.s32.totalorder %v795, 6
    %vm1298 = vcmp.eq.s32.totalorder %v798, 6
    %vm1299 = vcmp.eq.s32.totalorder %v801, 6
    %vm1300 = vcmp.eq.s32.totalorder %v804, 6
    %vm1301 = vcmp.eq.s32.totalorder %v807, 6
    %vm1302 = vcmp.eq.s32.totalorder %v810, 6
    %vm1303 = vcmp.eq.s32.totalorder %v813, 6
    %vm1304 = vcmp.eq.s32.totalorder %v816, 6
    %vm1305 = vcmp.eq.s32.totalorder %v819, 6
    %vm1306 = vcmp.eq.s32.totalorder %v822, 6
    %vm1307 = vcmp.eq.s32.totalorder %v825, 6
    %vm1308 = vcmp.eq.s32.totalorder %v828, 6
    %vm1309 = vcmp.eq.s32.totalorder %v831, 6
    %vm1310 = vcmp.eq.s32.totalorder %v834, 6
    %vm1311 = vcmp.eq.s32.totalorder %v837, 6
    %vm1312 = vcmp.eq.s32.totalorder %v840, 6
    %vm1313 = vcmp.eq.s32.totalorder %v843, 6
    %vm1314 = vcmp.eq.s32.totalorder %v846, 6
    %vm1315 = vcmp.eq.s32.totalorder %v849, 6
    %vm1316 = vcmp.eq.s32.totalorder %v852, 6
    %vm1317 = vcmp.eq.s32.totalorder %v855, 6
    %vm1318 = vcmp.eq.s32.totalorder %v858, 6
    %vm1319 = vcmp.eq.s32.totalorder %v861, 6
    %vm1320 = vcmp.eq.s32.totalorder %v864, 6
    %vm1321 = vcmp.eq.s32.totalorder %v867, 6
    %vm1322 = vcmp.eq.s32.totalorder %v870, 6
    %vm1323 = vcmp.eq.s32.totalorder %v873, 6
    %vm1324 = vcmp.eq.s32.totalorder %v876, 6
    %vm1325 = vcmp.eq.s32.totalorder %v879, 6
    %v1326 = vld [vmem:[%s3 + $0xc] sm:$0x1]
    %v1327 = vlaneseq
    %v1328 = vshrl.u32 %v1327, 7
    %v1329 = vsub.s32 0, %v1328
    %v1330 = vrot.slane %v1326, %v1329
    %v1331 = vsel %vm1294, %v1330, %v1262
    %v1332 = vsel %vm1295, %v1330, %v1263
    %v1333 = vsel %vm1296, %v1330, %v1264
    %v1334 = vsel %vm1297, %v1330, %v1265
    %v1335 = vsel %vm1298, %v1330, %v1266
    %v1336 = vsel %vm1299, %v1330, %v1267
    %v1337 = vsel %vm1300, %v1330, %v1268
    %v1338 = vsel %vm1301, %v1330, %v1269
    %v1339 = vsel %vm1302, %v1330, %v1270
    %v1340 = vsel %vm1303, %v1330, %v1271
    %v1341 = vsel %vm1304, %v1330, %v1272
    %v1342 = vsel %vm1305, %v1330, %v1273
    %v1343 = vsel %vm1306, %v1330, %v1274
    %v1344 = vsel %vm1307, %v1330, %v1275
    %v1345 = vsel %vm1308, %v1330, %v1276
    %v1346 = vsel %vm1309, %v1330, %v1277
    %v1347 = vsel %vm1310, %v1330, %v1278
    %v1348 = vsel %vm1311, %v1330, %v1279
    %v1349 = vsel %vm1312, %v1330, %v1280
    %v1350 = vsel %vm1313, %v1330, %v1281
    %v1351 = vsel %vm1314, %v1330, %v1282
    %v1352 = vsel %vm1315, %v1330, %v1283
    %v1353 = vsel %vm1316, %v1330, %v1284
    %v1354 = vsel %vm1317, %v1330, %v1285
    %v1355 = vsel %vm1318, %v1330, %v1286
    %v1356 = vsel %vm1319, %v1330, %v1287
    %v1357 = vsel %vm1320, %v1330, %v1288
    %v1358 = vsel %vm1321, %v1330, %v1289
    %v1359 = vsel %vm1322, %v1330, %v1290
    %v1360 = vsel %vm1323, %v1330, %v1291
    %v1361 = vsel %vm1324, %v1330, %v1292
    %v1362 = vsel %vm1325, %v1330, %v1293
    %1363 = vst [vmem:[#allocation2 + $0x10] sm:$0xff] %v1331
    %1364 = vst [vmem:[#allocation2 + $0x28] sm:$0xff] %v1332
    %1365 = vst [vmem:[#allocation2 + $0x40] sm:$0xff] %v1333
    %1366 = vst [vmem:[#allocation2 + $0x58] sm:$0xff] %v1334
    %1367 = vst [vmem:[#allocation2 + $0x70] sm:$0xff] %v1335
    %1368 = vst [vmem:[#allocation2 + $0x88] sm:$0xff] %v1336
    %1369 = vst [vmem:[#allocation2 + $0xa0] sm:$0xff] %v1337
    %1370 = vst [vmem:[#allocation2 + $0xb8] sm:$0xff] %v1338
    %1371 = vst [vmem:[#allocation2 + $0xd0] sm:$0xff] %v1339
    %1372 = vst [vmem:[#allocation2 + $0xe8] sm:$0xff] %v1340
    %1373 = vst [vmem:[#allocation2 + $0x100] sm:$0xff] %v1341
    %1374 = vst [vmem:[#allocation2 + $0x118] sm:$0xff] %v1342
    %1375 = vst [vmem:[#allocation2 + $0x130] sm:$0xff] %v1343
    %1376 = vst [vmem:[#allocation2 + $0x148] sm:$0xff] %v1344
    %1377 = vst [vmem:[#allocation2 + $0x160] sm:$0xff] %v1345
    %1378 = vst [vmem:[#allocation2 + $0x178] sm:$0xff] %v1346
    %1379 = vst [vmem:[#allocation2 + $0x190] sm:$0xff] %v1347
    %1380 = vst [vmem:[#allocation2 + $0x1a8] sm:$0xff] %v1348
    %1381 = vst [vmem:[#allocation2 + $0x1c0] sm:$0xff] %v1349
    %1382 = vst [vmem:[#allocation2 + $0x1d8] sm:$0xff] %v1350
    %1383 = vst [vmem:[#allocation2 + $0x1f0] sm:$0xff] %v1351
    %1384 = vst [vmem:[#allocation2 + $0x208] sm:$0xff] %v1352
    %1385 = vst [vmem:[#allocation2 + $0x220] sm:$0xff] %v1353
    %1386 = vst [vmem:[#allocation2 + $0x238] sm:$0xff] %v1354
    %1387 = vst [vmem:[#allocation2 + $0x250] sm:$0xff] %v1355
    %1388 = vst [vmem:[#allocation2 + $0x268] sm:$0xff] %v1356
    %1389 = vst [vmem:[#allocation2 + $0x280] sm:$0xff] %v1357
    %1390 = vst [vmem:[#allocation2 + $0x298] sm:$0xff] %v1358
    %1391 = vst [vmem:[#allocation2 + $0x2b0] sm:$0xff] %v1359
    %1392 = vst [vmem:[#allocation2 + $0x2c8] sm:$0xff] %v1360
    %1393 = vst [vmem:[#allocation2 + $0x2e0] sm:$0xff] %v1361
    %1394 = vst [vmem:[#allocation2 + $0x2f8] sm:$0xff] %v1362
    // Predicated region
    $region18: #{tpu_custom_call.1} parent=1 // pred_check
      _
    $region19: #{tpu_custom_call.1} parent=1 // pred_check_branch
      %1396 = sbr.rel (0) target = $region21
    $region20: #{tpu_custom_call.1} parent=1 // pred_region
      %s1398 = ssub.s32 12288, 12288
      %1399 = vsyncadd [#allocation3], %s1398
      %s1400 = sshll.u32 [#allocation2], 4
      %s1401 = int_to_ptr.vmem [resolvable:$true] %s1400
      %1406 = dma.vmem_to_hbm [thread:$0]  %s1401, 12288, %s4, [#allocation3], 384, 384, 24
    $region21: #{tpu_custom_call.1} parent=1 // pred_fallthru
      _
    // Predicated region
    $region22: #{tpu_custom_call.1} parent=1 // pred_check
      _
    $region23: #{tpu_custom_call.1} parent=1 // pred_check_branch
      %1408 = sbr.rel (0) target = $region25
    $region24: #{tpu_custom_call.1} parent=1 // pred_region
      %1409 = dma.done [#allocation3], 12288
    $region25: #{tpu_custom_call.1} parent=1 // pred_fallthru
      _
    %1410 = vsyncpa [#allocation3], 1

</llo_original>
